<compile_context>
chip_gen: v7x
topology: tpu7x:2x2x1
jax: 0.10.0
libtpu: 0.0.40
codegen_flags: <defaults>
</compile_context>

<pallas_src>
import functools
import math

import jax
import jax.numpy as jnp
from jax.experimental import pallas as pl
from jax.experimental.pallas import tpu as pltpu

_LN_EPS = 1e-5
_INV_SQRT2 = 0.7071067811865476


def _tpu_config():
    """Per-generation tiling knobs.

    v5e/v6e: 128 MiB VMEM, 1 TensorCore -> large row tiles + 64 MiB scoped
    limit (fewer weight re-streams).  v7x-like (64 MiB per core, 2 cores):
    smaller row tiles, 32 MiB limit, and force >=2 row blocks on the parallel
    axis so both cores stay busy even when the column axis is "arbitrary".
    """
    vmem_bytes = 64 * 1024 * 1024
    try:
        vmem_bytes = int(pltpu.get_tpu_info().vmem_capacity_bytes)
    except Exception:
        pass
    if vmem_bytes >= 100 * 1024 * 1024:          # v5e / v6e (128 MiB)
        return 1024, 256, 64 * 1024 * 1024, False
    return 512, 256, 32 * 1024 * 1024, True      # v7x-like (64 MiB / core)


_TM_TARGET, _TN_TARGET, _VMEM_LIMIT, _SPLIT_ROWS_FOR_CORES = _tpu_config()


def _compiler_params(semantics):
    return pltpu.CompilerParams(
        dimension_semantics=semantics,
        vmem_limit_bytes=_VMEM_LIMIT,
    )


def _tiles(M, N, *, force_row_split=False):
    """Pick (tm, tn): full dim when small, aligned target tiles when large."""
    tm = M if M <= _TM_TARGET else _TM_TARGET           # targets are 8-aligned
    if (force_row_split and _SPLIT_ROWS_FOR_CORES and M >= 16
            and pl.cdiv(M, tm) < 2):
        # Two sublane-aligned row blocks so both TensorCores get a block.
        tm = (((M + 1) // 2) + 7) // 8 * 8
    tn = N if N <= _TN_TARGET else _TN_TARGET            # targets are 128-aligned
    return tm, tn, pl.cdiv(M, tm), pl.cdiv(N, tn)


def _bf16(w):
    # Weights are pre-cast at init; this is a no-op safety net under jit.
    return w if w.dtype == jnp.bfloat16 else w.astype(jnp.bfloat16)


# ----------------------------- Pallas kernels ------------------------------

def _linear_kernel(x_ref, w_ref, b_ref, o_ref):
    # Activation cast to bf16 in-kernel (free VPU work under the MXU).
    acc = jnp.dot(x_ref[...].astype(jnp.bfloat16), w_ref[...],
                  preferred_element_type=jnp.float32)
    o_ref[...] = (acc + b_ref[...]).astype(o_ref.dtype)


def _linear_residual_kernel(x_ref, w_ref, b_ref, r_ref, o_ref):
    # out = residual + x @ w + b   (residual add fused into the epilogue)
    acc = jnp.dot(x_ref[...].astype(jnp.bfloat16), w_ref[...],
                  preferred_element_type=jnp.float32)
    o_ref[...] = (r_ref[...] + acc + b_ref[...]).astype(o_ref.dtype)


def _ln_linear_kernel(x_ref, g_ref, b_ref, w_ref, bias_ref, o_ref, xn_ref, *,
                      gelu):
    # Fused LayerNorm (f32) + linear (+ optional exact GELU).  The normalized
    # activations are computed once per row block (j == 0) and cached in a
    # bf16 VMEM scratch that is reused for every column tile.
    @pl.when(pl.program_id(1) == 0)
    def _():
        x = x_ref[...]
        mean = jnp.mean(x, axis=-1, keepdims=True)
        var = jnp.mean(jnp.square(x - mean), axis=-1, keepdims=True)
        xn = (x - mean) * jax.lax.rsqrt(var + _LN_EPS) * g_ref[...] + b_ref[...]
        xn_ref[...] = xn.astype(xn_ref.dtype)

    acc = jnp.dot(xn_ref[...], w_ref[...],
                  preferred_element_type=jnp.float32) + bias_ref[...]
    if gelu:
        # exact GELU (matches PyTorch F.gelu(approximate='none')), f32 math
        acc = 0.5 * acc * (1.0 + jax.lax.erf(acc * _INV_SQRT2))
    o_ref[...] = acc.astype(o_ref.dtype)


def _attention_kernel(qkv_ref, o_ref, *, num_heads):
    # One batch element per grid step.  qkv_ref block: (1, S, 3E) bf16,
    # o_ref block: (1, S, E).  Heads are static slices of the lane axis, so
    # there is no split / head transpose anywhere, and the output is written
    # lane-dense directly into the [B, S, E] layout the out-projection wants.
    S = qkv_ref.shape[1]
    E = qkv_ref.shape[2] // 3
    Dh = E // num_heads
    scale = 1.0 / math.sqrt(Dh)
    for h in range(num_heads):
        q = qkv_ref[0, :, h * Dh:(h + 1) * Dh]              # [S, Dh] bf16
        k = qkv_ref[0, :, E + h * Dh:E + (h + 1) * Dh]
        v = qkv_ref[0, :, 2 * E + h * Dh:2 * E + (h + 1) * Dh]
        # Fold 1/sqrt(Dh) into q (S*Dh mults) instead of the S*S score matrix.
        s = jax.lax.dot_general(q * scale, k, (((1,), (1,)), ((), ())),
                                preferred_element_type=jnp.float32)  # [S, S]
        m = jnp.max(s, axis=-1, keepdims=True)
        p = jnp.exp(s - m)
        l = jnp.sum(p, axis=-1, keepdims=True)
        p = p * pl.reciprocal(l, approx=True)                # EUP slot
        out = jnp.dot(p.astype(jnp.bfloat16), v,
                      preferred_element_type=jnp.float32)
        o_ref[0, :, h * Dh:(h + 1) * Dh] = out.astype(o_ref.dtype)


# ------------------------------ op wrappers --------------------------------

def linear(x, w, b, out_dtype=jnp.float32):
    """x: [..., K] -> [..., N], tiled over (M, N); bf16 cast happens in-kernel."""
    orig = x.shape
    K = orig[-1]
    N = w.shape[1]
    x2 = x.reshape(-1, K)
    M = x2.shape[0]
    tm, tn, gm, gn = _tiles(M, N)
    out = pl.pallas_call(
        _linear_kernel,
        out_shape=jax.ShapeDtypeStruct((M, N), out_dtype),
        grid=(gm, gn),
        in_specs=[
            pl.BlockSpec((tm, K), lambda i, j: (i, 0)),
            pl.BlockSpec((K, tn), lambda i, j: (0, j)),
            pl.BlockSpec((1, tn), lambda i, j: (0, j)),
        ],
        out_specs=pl.BlockSpec((tm, tn), lambda i, j: (i, j)),
        compiler_params=_compiler_params(("parallel", "parallel")),
        cost_estimate=pl.CostEstimate(
            flops=2 * M * K * N, transcendentals=0,
            bytes_accessed=M * K * x2.dtype.itemsize + 2 * K * N + 4 * N
            + M * N * jnp.dtype(out_dtype).itemsize),
    )(x2, _bf16(w), b.reshape(1, N).astype(jnp.float32))
    return out.reshape(orig[:-1] + (N,))


def ln_linear(x, g, b, w, bias, *, gelu=False, out_dtype=jnp.float32):
    """Fused LayerNorm(eps=1e-5) + linear (+ optional exact GELU)."""
    orig = x.shape
    K = orig[-1]
    N = w.shape[1]
    x2 = x.reshape(-1, K).astype(jnp.float32)
    M = x2.shape[0]
    tm, tn, gm, gn = _tiles(M, N, force_row_split=True)
    kernel = functools.partial(_ln_linear_kernel, gelu=gelu)
    out = pl.pallas_call(
        kernel,
        out_shape=jax.ShapeDtypeStruct((M, N), out_dtype),
        grid=(gm, gn),
        in_specs=[
            pl.BlockSpec((tm, K), lambda i, j: (i, 0)),   # x resident over j
            pl.BlockSpec((1, K), lambda i, j: (0, 0)),    # ln gamma
            pl.BlockSpec((1, K), lambda i, j: (0, 0)),    # ln beta
            pl.BlockSpec((K, tn), lambda i, j: (0, j)),   # weight tile
            pl.BlockSpec((1, tn), lambda i, j: (0, j)),   # bias tile
        ],
        out_specs=pl.BlockSpec((tm, tn), lambda i, j: (i, j)),
        scratch_shapes=[pltpu.VMEM((tm, K), jnp.bfloat16)],  # cached LN output
        # j must be "arbitrary": the LN scratch is only valid if every core
        # that runs (i, j>0) also ran (i, 0).
        compiler_params=_compiler_params(("parallel", "arbitrary")),
        cost_estimate=pl.CostEstimate(
            flops=2 * M * K * N,
            transcendentals=M * N if gelu else 0,
            bytes_accessed=4 * M * K + 2 * K * N + 4 * N
            + M * N * jnp.dtype(out_dtype).itemsize),
    )(x2,
      g.reshape(1, K).astype(jnp.float32),
      b.reshape(1, K).astype(jnp.float32),
      _bf16(w),
      bias.reshape(1, N).astype(jnp.float32))
    return out.reshape(orig[:-1] + (N,))


def linear_residual(x, w, b, res):
    """out = res + x @ w + b  (residual fused into the matmul epilogue)."""
    orig = res.shape
    K = x.shape[-1]
    N = w.shape[1]
    x2 = x.reshape(-1, K)                       # already bf16 activations
    r2 = res.reshape(-1, N).astype(jnp.float32)
    M = x2.shape[0]
    tm, tn, gm, gn = _tiles(M, N)
    out = pl.pallas_call(
        _linear_residual_kernel,
        out_shape=jax.ShapeDtypeStruct((M, N), jnp.float32),
        grid=(gm, gn),
        in_specs=[
            pl.BlockSpec((tm, K), lambda i, j: (i, 0)),
            pl.BlockSpec((K, tn), lambda i, j: (0, j)),
            pl.BlockSpec((1, tn), lambda i, j: (0, j)),
            pl.BlockSpec((tm, tn), lambda i, j: (i, j)),
        ],
        out_specs=pl.BlockSpec((tm, tn), lambda i, j: (i, j)),
        compiler_params=_compiler_params(("parallel", "parallel")),
        cost_estimate=pl.CostEstimate(
            flops=2 * M * K * N, transcendentals=0,
            bytes_accessed=M * K * x2.dtype.itemsize + 2 * K * N + 4 * N
            + 8 * M * N),
    )(x2, _bf16(w), b.reshape(1, N).astype(jnp.float32), r2)
    return out.reshape(orig)


def attention(qkv, num_heads):
    """qkv: [B, S, 3E] bf16 -> [B, S, E] bf16, all heads of one batch element
    per grid step (no head split / merge relayouts)."""
    B, S, E3 = qkv.shape
    E = E3 // 3
    return pl.pallas_call(
        functools.partial(_attention_kernel, num_heads=num_heads),
        out_shape=jax.ShapeDtypeStruct((B, S, E), jnp.bfloat16),
        grid=(B,),
        in_specs=[pl.BlockSpec((1, S, E3), lambda b: (b, 0, 0))],
        out_specs=pl.BlockSpec((1, S, E), lambda b: (b, 0, 0)),
        compiler_params=_compiler_params(("parallel",)),
    )(qkv.astype(jnp.bfloat16))


# ------------------------------ ViT forward --------------------------------

def encoder_layer(p, x, num_heads):
    # --- pre-norm self-attention block: fused LN1 + QKV projection ---
    qkv = ln_linear(x, p["ln1_g"], p["ln1_b"], p["in_proj_w"], p["in_proj_b"],
                    out_dtype=jnp.bfloat16)                    # [B, S, 3E]
    a = attention(qkv, num_heads)                              # [B, S, E] bf16
    # out-projection with fused residual add
    x = linear_residual(a, p["out_proj_w"], p["out_proj_b"], x)

    # --- pre-norm MLP block: fused LN2 + FF1 + GELU, then FF2 + residual ---
    ff = ln_linear(x, p["ln2_g"], p["ln2_b"], p["ff1_w"], p["ff1_b"],
                   gelu=True, out_dtype=jnp.bfloat16)          # [B, S, MLP]
    x = linear_residual(ff, p["ff2_w"], p["ff2_b"], x)         # [B, S, E] f32
    return x


@functools.partial(jax.jit, static_argnames=("patch_size", "num_heads"))
def vit_forward(params, x, *, patch_size, num_heads):
    B, C, H, W = x.shape
    ps = patch_size
    E = params["pos"].shape[-1]
    assert H % ps == 0 and W % ps == 0

    # Patch extraction (glue): NCHW -> [B, P, C*ps*ps], patch vector ordered
    # (c, kh, kw) to match nn.Conv2d weight layout [E, C, ps, ps].
    hp, wp = H // ps, W // ps
    patches = (
        x.reshape(B, C, hp, ps, wp, ps)
        .transpose(0, 2, 4, 1, 3, 5)
        .reshape(B, hp * wp, C * ps * ps)
    )
    x_emb = linear(patches, params["patch_w"], params["patch_b"])  # [B, P, E]

    cls = jnp.broadcast_to(params["cls"], (B, 1, E))
    # TODO(synk): padding S to a multiple of 8 would remove the partial last
    # row tile in the linears but requires masking padded keys in attention.
    x_seq = jnp.concatenate([cls, x_emb], axis=1) + params["pos"]  # [B, P+1, E]
    # embedding_dropout / attn_dropout / mlp_dropout: identity in eval mode.

    for layer in params["layers"]:
        x_seq = encoder_layer(layer, x_seq, num_heads)

    cls_tok = x_seq[:, 0]                                          # [B, E]
    # fused final LayerNorm + classifier head
    logits = ln_linear(cls_tok, params["cls_ln_g"], params["cls_ln_b"],
                       params["head_w"], params["head_b"])         # [B, classes]
    return logits


# --------------------------- parameter creation -----------------------------

def init_params(key, *, img_size, in_channels, patch_size, num_layers,
                embed_dim, mlp_size, num_heads, num_classes):
    del num_heads  # kept out of the (jit-traced) param pytree
    num_patches = (img_size // patch_size) ** 2
    keys = iter(jax.random.split(key, 8 + 6 * num_layers))

    def w(shape, scale=0.02):
        # MXU-feeding weights are stored bf16 once here -> no per-forward cast.
        v = scale * jax.random.normal(next(keys), shape, dtype=jnp.float32)
        return v.astype(jnp.bfloat16)

    params = {
        # Conv2d weight [E, C, ps, ps] flattened to [C*ps*ps, E] (x @ W form).
        "patch_w": w((in_channels * patch_size * patch_size, embed_dim)),
        "patch_b": jnp.zeros((embed_dim,), jnp.float32),
        "cls": jax.random.normal(next(keys), (1, 1, embed_dim), dtype=jnp.float32),
        "pos": jax.random.normal(next(keys), (1, num_patches + 1, embed_dim),
                                 dtype=jnp.float32),
        "cls_ln_g": jnp.ones((embed_dim,), jnp.float32),
        "cls_ln_b": jnp.zeros((embed_dim,), jnp.float32),
        "head_w": w((embed_dim, num_classes)),
        "head_b": jnp.zeros((num_classes,), jnp.float32),
        "layers": [],
    }
    for _ in range(num_layers):
        params["layers"].append({
            "ln1_g": jnp.ones((embed_dim,), jnp.float32),
            "ln1_b": jnp.zeros((embed_dim,), jnp.float32),
            "in_proj_w": w((embed_dim, 3 * embed_dim)),
            "in_proj_b": jnp.zeros((3 * embed_dim,), jnp.float32),
            "out_proj_w": w((embed_dim, embed_dim)),
            "out_proj_b": jnp.zeros((embed_dim,), jnp.float32),
            "ln2_g": jnp.ones((embed_dim,), jnp.float32),
            "ln2_b": jnp.zeros((embed_dim,), jnp.float32),
            "ff1_w": w((embed_dim, mlp_size)),
            "ff1_b": jnp.zeros((mlp_size,), jnp.float32),
            "ff2_w": w((mlp_size, embed_dim)),
            "ff2_b": jnp.zeros((embed_dim,), jnp.float32),
        })
    return params


# ----------------------------------- main -----------------------------------

if __name__ == "__main__":
    # Small ViT config consistent with the module's forward semantics.
    B, C, IMG, PS = 2, 4, 16, 8
    E, MLP, HEADS, LAYERS, CLASSES = 32, 64, 4, 2, 10

    key = jax.random.PRNGKey(0)
    k_param, k_x = jax.random.split(key)
    params = init_params(
        k_param, img_size=IMG, in_channels=C, patch_size=PS,
        num_layers=LAYERS, embed_dim=E, mlp_size=MLP,
        num_heads=HEADS, num_classes=CLASSES,
    )
    x = jax.random.normal(k_x, (B, C, IMG, IMG), dtype=jnp.float32)

    logits = vit_forward(params, x, patch_size=PS, num_heads=HEADS)
    jax.block_until_ready(logits)
    assert logits.shape == (B, CLASSES)
    assert bool(jnp.all(jnp.isfinite(logits)))
    print("KERNEL_OK")
</pallas_src>

<mosaic_0001>
module attributes {stable_mosaic.version = 11 : i64} {
  func.func @_linear_kernel(%arg0: i32, %arg1: i32, %arg2: memref<8x256xf32, #tpu.memory_space<vmem>>, %arg3: memref<256x32xbf16, #tpu.memory_space<vmem>>, %arg4: memref<1x32xf32, #tpu.memory_space<vmem>>, %arg5: memref<8x32xf32, #tpu.memory_space<vmem>>) attributes {dimension_semantics = [#tpu.dimension_semantics<parallel>, #tpu.dimension_semantics<parallel>], iteration_bounds = array<i64: 1, 1>, scalar_prefetch = 0 : i64, scratch_operands = 0 : i64, tpu.core_type = #tpu.core_type<tc>, window_params = [{transform_indices = @transform_0, window_bounds = array<i64: 8, 256>}, {transform_indices = @transform_1, window_bounds = array<i64: 256, 32>}, {transform_indices = @transform_2, window_bounds = array<i64: 1, 32>}, {transform_indices = @transform_3, window_bounds = array<i64: 8, 32>}]} {
    %c0 = arith.constant 0 : index
    %c0_0 = arith.constant 0 : index
    %0 = vector.load %arg2[%c0, %c0_0] : memref<8x256xf32, #tpu.memory_space<vmem>>, vector<8x256xf32>
    %1 = arith.truncf %0 : vector<8x256xf32> to vector<8x256xbf16>
    %c0_1 = arith.constant 0 : index
    %c0_2 = arith.constant 0 : index
    %2 = vector.load %arg3[%c0_1, %c0_2] : memref<256x32xbf16, #tpu.memory_space<vmem>>, vector<256x32xbf16>
    %cst = arith.constant dense<0.000000e+00> : vector<8x32xf32>
    %3 = tpu.matmul %1, %2, %cst {dimension_numbers = #tpu.dot_dimension_numbers<[1], [0], [0], [1], [0, 0, 1, 1], [], []>} : vector<8x256xbf16>, vector<256x32xbf16>, vector<8x32xf32> -> vector<8x32xf32>
    %c0_3 = arith.constant 0 : index
    %c0_4 = arith.constant 0 : index
    %4 = vector.load %arg4[%c0_3, %c0_4] : memref<1x32xf32, #tpu.memory_space<vmem>>, vector<1x32xf32>
    %5 = vector.broadcast %4 : vector<1x32xf32> to vector<8x32xf32>
    %6 = arith.addf %3, %5 : vector<8x32xf32>
    %c0_5 = arith.constant 0 : index
    %c0_6 = arith.constant 0 : index
    %7 = vector.load %arg5[%c0_5, %c0_6] : memref<8x32xf32, #tpu.memory_space<vmem>>, vector<8x32xf32>
    tpu.vector_store %arg5[%c0_5, %c0_6], %6 {strides = array<i32>} : memref<8x32xf32, #tpu.memory_space<vmem>>, vector<8x32xf32>,
    return
  }
  func.func @transform_0(%arg0: i32, %arg1: i32) -> (i32, i32) {
    %c0_i32 = arith.constant 0 : i32
    %c0_i32_0 = arith.constant 0 : i32
    return %arg0, %c0_i32 : i32, i32
  }
  func.func @transform_1(%arg0: i32, %arg1: i32) -> (i32, i32) {
    %c0_i32 = arith.constant 0 : i32
    %c0_i32_0 = arith.constant 0 : i32
    return %c0_i32, %arg1 : i32, i32
  }
  func.func @transform_2(%arg0: i32, %arg1: i32) -> (i32, i32) {
    %c0_i32 = arith.constant 0 : i32
    %c0_i32_0 = arith.constant 0 : i32
    return %c0_i32, %arg1 : i32, i32
  }
  func.func @transform_3(%arg0: i32, %arg1: i32) -> (i32, i32) {
    %c0_i32 = arith.constant 0 : i32
    return %arg0, %arg1 : i32, i32
  }
}

module attributes {stable_mosaic.version = 11 : i64} {
  func.func @_attention_kernel(%arg0: i32, %arg1: memref<1x5x96xbf16, #tpu.memory_space<vmem>>, %arg2: memref<1x5x32xbf16, #tpu.memory_space<vmem>>) attributes {dimension_semantics = [#tpu.dimension_semantics<parallel>], iteration_bounds = array<i64: 2>, scalar_prefetch = 0 : i64, scratch_operands = 0 : i64, tpu.core_type = #tpu.core_type<tc>, window_params = [{transform_indices = @transform_0, window_bounds = array<i64: 1, 5, 96>}, {transform_indices = @transform_1, window_bounds = array<i64: 1, 5, 32>}]} {
    %c0 = arith.constant 0 : index
    %c0_0 = arith.constant 0 : index
    %c0_1 = arith.constant 0 : index
    %0 = vector.load %arg1[%c0, %c0_0, %c0_1] : memref<1x5x96xbf16, #tpu.memory_space<vmem>>, vector<1x5x8xbf16>
    %1 = vector.shape_cast %0 : vector<1x5x8xbf16> to vector<5x8xbf16>
    %c0_2 = arith.constant 0 : index
    %c0_3 = arith.constant 0 : index
    %c32 = arith.constant 32 : index
    %2 = vector.load %arg1[%c0_2, %c0_3, %c32] : memref<1x5x96xbf16, #tpu.memory_space<vmem>>, vector<1x5x8xbf16>
    %3 = vector.shape_cast %2 : vector<1x5x8xbf16> to vector<5x8xbf16>
    %c0_4 = arith.constant 0 : index
    %c0_5 = arith.constant 0 : index
    %c64 = arith.constant 64 : index
    %4 = vector.load %arg1[%c0_4, %c0_5, %c64] : memref<1x5x96xbf16, #tpu.memory_space<vmem>>, vector<1x5x8xbf16>
    %5 = vector.shape_cast %4 : vector<1x5x8xbf16> to vector<5x8xbf16>
    %cst = arith.constant 3.535160e-01 : bf16
    %6 = vector.broadcast %cst : bf16 to vector<5x8xbf16>
    %7 = arith.mulf %1, %6 : vector<5x8xbf16>
    %cst_6 = arith.constant dense<0.000000e+00> : vector<5x5xf32>
    %8 = tpu.matmul %7, %3, %cst_6 {dimension_numbers = #tpu.dot_dimension_numbers<[1], [1], [0], [0], [0, 0, 1, 0], [], []>} : vector<5x8xbf16>, vector<5x8xbf16>, vector<5x5xf32> -> vector<5x5xf32>
    %cst_7 = arith.constant dense<0xFF800000> : vector<5xf32>
    %9 = vector.multi_reduction <maximumf>, %8, %cst_7 [1] : vector<5x5xf32> to vector<5xf32>
    %10 = vector.shape_cast %9 : vector<5xf32> to vector<5x1xf32>
    %11 = vector.broadcast %10 : vector<5x1xf32> to vector<5x5xf32>
    %12 = arith.subf %8, %11 : vector<5x5xf32>
    %13 = math.exp %12 : vector<5x5xf32>
    %cst_8 = arith.constant dense<0.000000e+00> : vector<5xf32>
    %14 = vector.multi_reduction <add>, %13, %cst_8 [1] : vector<5x5xf32> to vector<5xf32>
    %15 = vector.shape_cast %14 : vector<5xf32> to vector<5x1xf32>
    %16 = tpu.reciprocal %15 {approx = true} : vector<5x1xf32> -> vector<5x1xf32>
    %17 = vector.broadcast %16 : vector<5x1xf32> to vector<5x5xf32>
    %18 = arith.mulf %13, %17 : vector<5x5xf32>
    %19 = arith.truncf %18 : vector<5x5xf32> to vector<5x5xbf16>
    %cst_9 = arith.constant dense<0.000000e+00> : vector<5x8xf32>
    %20 = tpu.matmul %19, %5, %cst_9 {dimension_numbers = #tpu.dot_dimension_numbers<[1], [0], [0], [1], [0, 0, 1, 1], [], []>} : vector<5x5xbf16>, vector<5x8xbf16>, vector<5x8xf32> -> vector<5x8xf32>
    %21 = arith.truncf %20 : vector<5x8xf32> to vector<5x8xbf16>
    %c0_10 = arith.constant 0 : index
    %c0_11 = arith.constant 0 : index
    %c0_12 = arith.constant 0 : index
    %22 = vector.load %arg2[%c0_10, %c0_11, %c0_12] : memref<1x5x32xbf16, #tpu.memory_space<vmem>>, vector<1x5x8xbf16>
    %23 = vector.shape_cast %22 : vector<1x5x8xbf16> to vector<5x8xbf16>
    %24 = vector.shape_cast %21 : vector<5x8xbf16> to vector<1x5x8xbf16>
    tpu.vector_store %arg2[%c0_10, %c0_11, %c0_12], %24 {strides = array<i32>} : memref<1x5x32xbf16, #tpu.memory_space<vmem>>, vector<1x5x8xbf16>,
    %c0_13 = arith.constant 0 : index
    %c0_14 = arith.constant 0 : index
    %c8 = arith.constant 8 : index
    %25 = vector.load %arg1[%c0_13, %c0_14, %c8] : memref<1x5x96xbf16, #tpu.memory_space<vmem>>, vector<1x5x8xbf16>
    %26 = vector.shape_cast %25 : vector<1x5x8xbf16> to vector<5x8xbf16>
    %c0_15 = arith.constant 0 : index
    %c0_16 = arith.constant 0 : index
    %c40 = arith.constant 40 : index
    %27 = vector.load %arg1[%c0_15, %c0_16, %c40] : memref<1x5x96xbf16, #tpu.memory_space<vmem>>, vector<1x5x8xbf16>
    %28 = vector.shape_cast %27 : vector<1x5x8xbf16> to vector<5x8xbf16>
    %c0_17 = arith.constant 0 : index
    %c0_18 = arith.constant 0 : index
    %c72 = arith.constant 72 : index
    %29 = vector.load %arg1[%c0_17, %c0_18, %c72] : memref<1x5x96xbf16, #tpu.memory_space<vmem>>, vector<1x5x8xbf16>
    %30 = vector.shape_cast %29 : vector<1x5x8xbf16> to vector<5x8xbf16>
    %cst_19 = arith.constant 3.535160e-01 : bf16
    %31 = vector.broadcast %cst_19 : bf16 to vector<5x8xbf16>
    %32 = arith.mulf %26, %31 : vector<5x8xbf16>
    %cst_20 = arith.constant dense<0.000000e+00> : vector<5x5xf32>
    %33 = tpu.matmul %32, %28, %cst_20 {dimension_numbers = #tpu.dot_dimension_numbers<[1], [1], [0], [0], [0, 0, 1, 0], [], []>} : vector<5x8xbf16>, vector<5x8xbf16>, vector<5x5xf32> -> vector<5x5xf32>
    %cst_21 = arith.constant dense<0xFF800000> : vector<5xf32>
    %34 = vector.multi_reduction <maximumf>, %33, %cst_21 [1] : vector<5x5xf32> to vector<5xf32>
    %35 = vector.shape_cast %34 : vector<5xf32> to vector<5x1xf32>
    %36 = vector.broadcast %35 : vector<5x1xf32> to vector<5x5xf32>
    %37 = arith.subf %33, %36 : vector<5x5xf32>
    %38 = math.exp %37 : vector<5x5xf32>
    %cst_22 = arith.constant dense<0.000000e+00> : vector<5xf32>
    %39 = vector.multi_reduction <add>, %38, %cst_22 [1] : vector<5x5xf32> to vector<5xf32>
    %40 = vector.shape_cast %39 : vector<5xf32> to vector<5x1xf32>
    %41 = tpu.reciprocal %40 {approx = true} : vector<5x1xf32> -> vector<5x1xf32>
    %42 = vector.broadcast %41 : vector<5x1xf32> to vector<5x5xf32>
    %43 = arith.mulf %38, %42 : vector<5x5xf32>
    %44 = arith.truncf %43 : vector<5x5xf32> to vector<5x5xbf16>
    %cst_23 = arith.constant dense<0.000000e+00> : vector<5x8xf32>
    %45 = tpu.matmul %44, %30, %cst_23 {dimension_numbers = #tpu.dot_dimension_numbers<[1], [0], [0], [1], [0, 0, 1, 1], [], []>} : vector<5x5xbf16>, vector<5x8xbf16>, vector<5x8xf32> -> vector<5x8xf32>
    %46 = arith.truncf %45 : vector<5x8xf32> to vector<5x8xbf16>
    %c0_24 = arith.constant 0 : index
    %c0_25 = arith.constant 0 : index
    %c8_26 = arith.constant 8 : index
    %47 = vector.load %arg2[%c0_24, %c0_25, %c8_26] : memref<1x5x32xbf16, #tpu.memory_space<vmem>>, vector<1x5x8xbf16>
    %48 = vector.shape_cast %47 : vector<1x5x8xbf16> to vector<5x8xbf16>
    %49 = vector.shape_cast %46 : vector<5x8xbf16> to vector<1x5x8xbf16>
    tpu.vector_store %arg2[%c0_24, %c0_25, %c8_26], %49 {strides = array<i32>} : memref<1x5x32xbf16, #tpu.memory_space<vmem>>, vector<1x5x8xbf16>,
    %c0_27 = arith.constant 0 : index
    %c0_28 = arith.constant 0 : index
    %c16 = arith.constant 16 : index
    %50 = vector.load %arg1[%c0_27, %c0_28, %c16] : memref<1x5x96xbf16, #tpu.memory_space<vmem>>, vector<1x5x8xbf16>
    %51 = vector.shape_cast %50 : vector<1x5x8xbf16> to vector<5x8xbf16>
    %c0_29 = arith.constant 0 : index
    %c0_30 = arith.constant 0 : index
    %c48 = arith.constant 48 : index
    %52 = vector.load %arg1[%c0_29, %c0_30, %c48] : memref<1x5x96xbf16, #tpu.memory_space<vmem>>, vector<1x5x8xbf16>
    %53 = vector.shape_cast %52 : vector<1x5x8xbf16> to vector<5x8xbf16>
    %c0_31 = arith.constant 0 : index
    %c0_32 = arith.constant 0 : index
    %c80 = arith.constant 80 : index
    %54 = vector.load %arg1[%c0_31, %c0_32, %c80] : memref<1x5x96xbf16, #tpu.memory_space<vmem>>, vector<1x5x8xbf16>
    %55 = vector.shape_cast %54 : vector<1x5x8xbf16> to vector<5x8xbf16>
    %cst_33 = arith.constant 3.535160e-01 : bf16
    %56 = vector.broadcast %cst_33 : bf16 to vector<5x8xbf16>
    %57 = arith.mulf %51, %56 : vector<5x8xbf16>
    %cst_34 = arith.constant dense<0.000000e+00> : vector<5x5xf32>
    %58 = tpu.matmul %57, %53, %cst_34 {dimension_numbers = #tpu.dot_dimension_numbers<[1], [1], [0], [0], [0, 0, 1, 0], [], []>} : vector<5x8xbf16>, vector<5x8xbf16>, vector<5x5xf32> -> vector<5x5xf32>
    %cst_35 = arith.constant dense<0xFF800000> : vector<5xf32>
    %59 = vector.multi_reduction <maximumf>, %58, %cst_35 [1] : vector<5x5xf32> to vector<5xf32>
    %60 = vector.shape_cast %59 : vector<5xf32> to vector<5x1xf32>
    %61 = vector.broadcast %60 : vector<5x1xf32> to vector<5x5xf32>
    %62 = arith.subf %58, %61 : vector<5x5xf32>
    %63 = math.exp %62 : vector<5x5xf32>
    %cst_36 = arith.constant dense<0.000000e+00> : vector<5xf32>
    %64 = vector.multi_reduction <add>, %63, %cst_36 [1] : vector<5x5xf32> to vector<5xf32>
    %65 = vector.shape_cast %64 : vector<5xf32> to vector<5x1xf32>
    %66 = tpu.reciprocal %65 {approx = true} : vector<5x1xf32> -> vector<5x1xf32>
    %67 = vector.broadcast %66 : vector<5x1xf32> to vector<5x5xf32>
    %68 = arith.mulf %63, %67 : vector<5x5xf32>
    %69 = arith.truncf %68 : vector<5x5xf32> to vector<5x5xbf16>
    %cst_37 = arith.constant dense<0.000000e+00> : vector<5x8xf32>
    %70 = tpu.matmul %69, %55, %cst_37 {dimension_numbers = #tpu.dot_dimension_numbers<[1], [0], [0], [1], [0, 0, 1, 1], [], []>} : vector<5x5xbf16>, vector<5x8xbf16>, vector<5x8xf32> -> vector<5x8xf32>
    %71 = arith.truncf %70 : vector<5x8xf32> to vector<5x8xbf16>
    %c0_38 = arith.constant 0 : index
    %c0_39 = arith.constant 0 : index
    %c16_40 = arith.constant 16 : index
    %72 = vector.load %arg2[%c0_38, %c0_39, %c16_40] : memref<1x5x32xbf16, #tpu.memory_space<vmem>>, vector<1x5x8xbf16>
    %73 = vector.shape_cast %72 : vector<1x5x8xbf16> to vector<5x8xbf16>
    %74 = vector.shape_cast %71 : vector<5x8xbf16> to vector<1x5x8xbf16>
    tpu.vector_store %arg2[%c0_38, %c0_39, %c16_40], %74 {strides = array<i32>} : memref<1x5x32xbf16, #tpu.memory_space<vmem>>, vector<1x5x8xbf16>,
    %c0_41 = arith.constant 0 : index
    %c0_42 = arith.constant 0 : index
    %c24 = arith.constant 24 : index
    %75 = vector.load %arg1[%c0_41, %c0_42, %c24] : memref<1x5x96xbf16, #tpu.memory_space<vmem>>, vector<1x5x8xbf16>
    %76 = vector.shape_cast %75 : vector<1x5x8xbf16> to vector<5x8xbf16>
    %c0_43 = arith.constant 0 : index
    %c0_44 = arith.constant 0 : index
    %c56 = arith.constant 56 : index
    %77 = vector.load %arg1[%c0_43, %c0_44, %c56] : memref<1x5x96xbf16, #tpu.memory_space<vmem>>, vector<1x5x8xbf16>
    %78 = vector.shape_cast %77 : vector<1x5x8xbf16> to vector<5x8xbf16>
    %c0_45 = arith.constant 0 : index
    %c0_46 = arith.constant 0 : index
    %c88 = arith.constant 88 : index
    %79 = vector.load %arg1[%c0_45, %c0_46, %c88] : memref<1x5x96xbf16, #tpu.memory_space<vmem>>, vector<1x5x8xbf16>
    %80 = vector.shape_cast %79 : vector<1x5x8xbf16> to vector<5x8xbf16>
    %cst_47 = arith.constant 3.535160e-01 : bf16
    %81 = vector.broadcast %cst_47 : bf16 to vector<5x8xbf16>
    %82 = arith.mulf %76, %81 : vector<5x8xbf16>
    %cst_48 = arith.constant dense<0.000000e+00> : vector<5x5xf32>
    %83 = tpu.matmul %82, %78, %cst_48 {dimension_numbers = #tpu.dot_dimension_numbers<[1], [1], [0], [0], [0, 0, 1, 0], [], []>} : vector<5x8xbf16>, vector<5x8xbf16>, vector<5x5xf32> -> vector<5x5xf32>
    %cst_49 = arith.constant dense<0xFF800000> : vector<5xf32>
    %84 = vector.multi_reduction <maximumf>, %83, %cst_49 [1] : vector<5x5xf32> to vector<5xf32>
    %85 = vector.shape_cast %84 : vector<5xf32> to vector<5x1xf32>
    %86 = vector.broadcast %85 : vector<5x1xf32> to vector<5x5xf32>
    %87 = arith.subf %83, %86 : vector<5x5xf32>
    %88 = math.exp %87 : vector<5x5xf32>
    %cst_50 = arith.constant dense<0.000000e+00> : vector<5xf32>
    %89 = vector.multi_reduction <add>, %88, %cst_50 [1] : vector<5x5xf32> to vector<5xf32>
    %90 = vector.shape_cast %89 : vector<5xf32> to vector<5x1xf32>
    %91 = tpu.reciprocal %90 {approx = true} : vector<5x1xf32> -> vector<5x1xf32>
    %92 = vector.broadcast %91 : vector<5x1xf32> to vector<5x5xf32>
    %93 = arith.mulf %88, %92 : vector<5x5xf32>
    %94 = arith.truncf %93 : vector<5x5xf32> to vector<5x5xbf16>
    %cst_51 = arith.constant dense<0.000000e+00> : vector<5x8xf32>
    %95 = tpu.matmul %94, %80, %cst_51 {dimension_numbers = #tpu.dot_dimension_numbers<[1], [0], [0], [1], [0, 0, 1, 1], [], []>} : vector<5x5xbf16>, vector<5x8xbf16>, vector<5x8xf32> -> vector<5x8xf32>
    %96 = arith.truncf %95 : vector<5x8xf32> to vector<5x8xbf16>
    %c0_52 = arith.constant 0 : index
    %c0_53 = arith.constant 0 : index
    %c24_54 = arith.constant 24 : index
    %97 = vector.load %arg2[%c0_52, %c0_53, %c24_54] : memref<1x5x32xbf16, #tpu.memory_space<vmem>>, vector<1x5x8xbf16>
    %98 = vector.shape_cast %97 : vector<1x5x8xbf16> to vector<5x8xbf16>
    %99 = vector.shape_cast %96 : vector<5x8xbf16> to vector<1x5x8xbf16>
    tpu.vector_store %arg2[%c0_52, %c0_53, %c24_54], %99 {strides = array<i32>} : memref<1x5x32xbf16, #tpu.memory_space<vmem>>, vector<1x5x8xbf16>,
    return
  }
  func.func @transform_0(%arg0: i32) -> (i32, i32, i32) {
    %c0_i32 = arith.constant 0 : i32
    %c0_i32_0 = arith.constant 0 : i32
    %c0_i32_1 = arith.constant 0 : i32
    return %arg0, %c0_i32, %c0_i32_0 : i32, i32, i32
  }
  func.func @transform_1(%arg0: i32) -> (i32, i32, i32) {
    %c0_i32 = arith.constant 0 : i32
    %c0_i32_0 = arith.constant 0 : i32
    %c0_i32_1 = arith.constant 0 : i32
    return %arg0, %c0_i32, %c0_i32_0 : i32, i32, i32
  }
}

module attributes {stable_mosaic.version = 11 : i64} {
  func.func @_ln_linear_kernel(%arg0: i32, %arg1: i32, %arg2: memref<10x32xf32, #tpu.memory_space<vmem>>, %arg3: memref<1x32xf32, #tpu.memory_space<vmem>>, %arg4: memref<1x32xf32, #tpu.memory_space<vmem>>, %arg5: memref<32x96xbf16, #tpu.memory_space<vmem>>, %arg6: memref<1x96xf32, #tpu.memory_space<vmem>>, %arg7: memref<10x96xbf16, #tpu.memory_space<vmem>>, %arg8: memref<10x32xbf16, #tpu.memory_space<vmem>>) attributes {dimension_semantics = [#tpu.dimension_semantics<parallel>, #tpu.dimension_semantics<arbitrary>], iteration_bounds = array<i64: 1, 1>, scalar_prefetch = 0 : i64, scratch_operands = 1 : i64, tpu.core_type = #tpu.core_type<tc>, window_params = [{transform_indices = @transform_0, window_bounds = array<i64: 10, 32>}, {pipeline_mode = #tpu.pipeline_mode<synchronous>, transform_indices = @transform_1, window_bounds = array<i64: 1, 32>}, {pipeline_mode = #tpu.pipeline_mode<synchronous>, transform_indices = @transform_2, window_bounds = array<i64: 1, 32>}, {transform_indices = @transform_3, window_bounds = array<i64: 32, 96>}, {transform_indices = @transform_4, window_bounds = array<i64: 1, 96>}, {transform_indices = @transform_5, window_bounds = array<i64: 10, 96>}]} {
    %c0_i32 = arith.constant 0 : i32
    %0 = arith.cmpi eq, %arg1, %c0_i32 : i32
    %1 = arith.extui %0 : i1 to i32
    %c0_i32_0 = arith.constant 0 : i32
    %2 = arith.cmpi ne, %1, %c0_i32_0 : i32
    scf.if %2 {
      %c0_8 = arith.constant 0 : index
      %c0_9 = arith.constant 0 : index
      %11 = vector.load %arg2[%c0_8, %c0_9] : memref<10x32xf32, #tpu.memory_space<vmem>>, vector<10x32xf32>
      %cst_10 = arith.constant dense<0.000000e+00> : vector<10xf32>
      %12 = vector.multi_reduction <add>, %11, %cst_10 [1] : vector<10x32xf32> to vector<10xf32>
      %13 = vector.shape_cast %12 : vector<10xf32> to vector<10x1xf32>
      %cst_11 = arith.constant 3.200000e+01 : f32
      %14 = vector.broadcast %cst_11 : f32 to vector<10x1xf32>
      %15 = arith.divf %13, %14 : vector<10x1xf32>
      %16 = vector.broadcast %15 : vector<10x1xf32> to vector<10x32xf32>
      %17 = arith.subf %11, %16 : vector<10x32xf32>
      %18 = arith.mulf %17, %17 : vector<10x32xf32>
      %cst_12 = arith.constant dense<0.000000e+00> : vector<10xf32>
      %19 = vector.multi_reduction <add>, %18, %cst_12 [1] : vector<10x32xf32> to vector<10xf32>
      %20 = vector.shape_cast %19 : vector<10xf32> to vector<10x1xf32>
      %cst_13 = arith.constant 3.200000e+01 : f32
      %21 = vector.broadcast %cst_13 : f32 to vector<10x1xf32>
      %22 = arith.divf %20, %21 : vector<10x1xf32>
      %23 = vector.broadcast %15 : vector<10x1xf32> to vector<10x32xf32>
      %24 = arith.subf %11, %23 : vector<10x32xf32>
      %cst_14 = arith.constant 9.99999974E-6 : f32
      %25 = vector.broadcast %cst_14 : f32 to vector<10x1xf32>
      %26 = arith.addf %22, %25 : vector<10x1xf32>
      %27 = math.rsqrt %26 : vector<10x1xf32>
      %28 = vector.broadcast %27 : vector<10x1xf32> to vector<10x32xf32>
      %29 = arith.mulf %24, %28 : vector<10x32xf32>
      %c0_15 = arith.constant 0 : index
      %c0_16 = arith.constant 0 : index
      %30 = vector.load %arg3[%c0_15, %c0_16] : memref<1x32xf32, #tpu.memory_space<vmem>>, vector<1x32xf32>
      %31 = vector.broadcast %30 : vector<1x32xf32> to vector<10x32xf32>
      %32 = arith.mulf %29, %31 : vector<10x32xf32>
      %c0_17 = arith.constant 0 : index
      %c0_18 = arith.constant 0 : index
      %33 = vector.load %arg4[%c0_17, %c0_18] : memref<1x32xf32, #tpu.memory_space<vmem>>, vector<1x32xf32>
      %34 = vector.broadcast %33 : vector<1x32xf32> to vector<10x32xf32>
      %35 = arith.addf %32, %34 : vector<10x32xf32>
      %36 = arith.truncf %35 : vector<10x32xf32> to vector<10x32xbf16>
      %c0_19 = arith.constant 0 : index
      %c0_20 = arith.constant 0 : index
      %37 = vector.load %arg8[%c0_19, %c0_20] : memref<10x32xbf16, #tpu.memory_space<vmem>>, vector<10x32xbf16>
      tpu.vector_store %arg8[%c0_19, %c0_20], %36 {strides = array<i32>} : memref<10x32xbf16, #tpu.memory_space<vmem>>, vector<10x32xbf16>,
    } else {
    }
    %c0 = arith.constant 0 : index
    %c0_1 = arith.constant 0 : index
    %3 = vector.load %arg8[%c0, %c0_1] : memref<10x32xbf16, #tpu.memory_space<vmem>>, vector<10x32xbf16>
    %c0_2 = arith.constant 0 : index
    %c0_3 = arith.constant 0 : index
    %4 = vector.load %arg5[%c0_2, %c0_3] : memref<32x96xbf16, #tpu.memory_space<vmem>>, vector<32x96xbf16>
    %cst = arith.constant dense<0.000000e+00> : vector<10x96xf32>
    %5 = tpu.matmul %3, %4, %cst {dimension_numbers = #tpu.dot_dimension_numbers<[1], [0], [0], [1], [0, 0, 1, 1], [], []>} : vector<10x32xbf16>, vector<32x96xbf16>, vector<10x96xf32> -> vector<10x96xf32>
    %c0_4 = arith.constant 0 : index
    %c0_5 = arith.constant 0 : index
    %6 = vector.load %arg6[%c0_4, %c0_5] : memref<1x96xf32, #tpu.memory_space<vmem>>, vector<1x96xf32>
    %7 = vector.broadcast %6 : vector<1x96xf32> to vector<10x96xf32>
    %8 = arith.addf %5, %7 : vector<10x96xf32>
    %9 = arith.truncf %8 : vector<10x96xf32> to vector<10x96xbf16>
    %c0_6 = arith.constant 0 : index
    %c0_7 = arith.constant 0 : index
    %10 = vector.load %arg7[%c0_6, %c0_7] : memref<10x96xbf16, #tpu.memory_space<vmem>>, vector<10x96xbf16>
    tpu.vector_store %arg7[%c0_6, %c0_7], %9 {strides = array<i32>} : memref<10x96xbf16, #tpu.memory_space<vmem>>, vector<10x96xbf16>,
    return
  }
  func.func @transform_0(%arg0: i32, %arg1: i32) -> (i32, i32) {
    %c0_i32 = arith.constant 0 : i32
    %c0_i32_0 = arith.constant 0 : i32
    return %arg0, %c0_i32 : i32, i32
  }
  func.func @transform_1(%arg0: i32, %arg1: i32) -> (i32, i32) {
    %c0_i32 = arith.constant 0 : i32
    %c0_i32_0 = arith.constant 0 : i32
    %c0_i32_1 = arith.constant 0 : i32
    return %c0_i32, %c0_i32_0 : i32, i32
  }
  func.func @transform_2(%arg0: i32, %arg1: i32) -> (i32, i32) {
    %c0_i32 = arith.constant 0 : i32
    %c0_i32_0 = arith.constant 0 : i32
    %c0_i32_1 = arith.constant 0 : i32
    return %c0_i32, %c0_i32_0 : i32, i32
  }
  func.func @transform_3(%arg0: i32, %arg1: i32) -> (i32, i32) {
    %c0_i32 = arith.constant 0 : i32
    %c0_i32_0 = arith.constant 0 : i32
    return %c0_i32, %arg1 : i32, i32
  }
  func.func @transform_4(%arg0: i32, %arg1: i32) -> (i32, i32) {
    %c0_i32 = arith.constant 0 : i32
    %c0_i32_0 = arith.constant 0 : i32
    return %c0_i32, %arg1 : i32, i32
  }
  func.func @transform_5(%arg0: i32, %arg1: i32) -> (i32, i32) {
    %c0_i32 = arith.constant 0 : i32
    return %arg0, %arg1 : i32, i32
  }
}

module attributes {stable_mosaic.version = 11 : i64} {
  func.func @_linear_residual_kernel(%arg0: i32, %arg1: i32, %arg2: memref<10x32xbf16, #tpu.memory_space<vmem>>, %arg3: memref<32x32xbf16, #tpu.memory_space<vmem>>, %arg4: memref<1x32xf32, #tpu.memory_space<vmem>>, %arg5: memref<10x32xf32, #tpu.memory_space<vmem>>, %arg6: memref<10x32xf32, #tpu.memory_space<vmem>>) attributes {dimension_semantics = [#tpu.dimension_semantics<parallel>, #tpu.dimension_semantics<parallel>], iteration_bounds = array<i64: 1, 1>, scalar_prefetch = 0 : i64, scratch_operands = 0 : i64, tpu.core_type = #tpu.core_type<tc>, window_params = [{transform_indices = @transform_0, window_bounds = array<i64: 10, 32>}, {transform_indices = @transform_1, window_bounds = array<i64: 32, 32>}, {transform_indices = @transform_2, window_bounds = array<i64: 1, 32>}, {transform_indices = @transform_3, window_bounds = array<i64: 10, 32>}, {transform_indices = @transform_4, window_bounds = array<i64: 10, 32>}]} {
    %c0 = arith.constant 0 : index
    %c0_0 = arith.constant 0 : index
    %0 = vector.load %arg2[%c0, %c0_0] : memref<10x32xbf16, #tpu.memory_space<vmem>>, vector<10x32xbf16>
    %c0_1 = arith.constant 0 : index
    %c0_2 = arith.constant 0 : index
    %1 = vector.load %arg3[%c0_1, %c0_2] : memref<32x32xbf16, #tpu.memory_space<vmem>>, vector<32x32xbf16>
    %cst = arith.constant dense<0.000000e+00> : vector<10x32xf32>
    %2 = tpu.matmul %0, %1, %cst {dimension_numbers = #tpu.dot_dimension_numbers<[1], [0], [0], [1], [0, 0, 1, 1], [], []>} : vector<10x32xbf16>, vector<32x32xbf16>, vector<10x32xf32> -> vector<10x32xf32>
    %c0_3 = arith.constant 0 : index
    %c0_4 = arith.constant 0 : index
    %3 = vector.load %arg5[%c0_3, %c0_4] : memref<10x32xf32, #tpu.memory_space<vmem>>, vector<10x32xf32>
    %4 = arith.addf %3, %2 : vector<10x32xf32>
    %c0_5 = arith.constant 0 : index
    %c0_6 = arith.constant 0 : index
    %5 = vector.load %arg4[%c0_5, %c0_6] : memref<1x32xf32, #tpu.memory_space<vmem>>, vector<1x32xf32>
    %6 = vector.broadcast %5 : vector<1x32xf32> to vector<10x32xf32>
    %7 = arith.addf %4, %6 : vector<10x32xf32>
    %c0_7 = arith.constant 0 : index
    %c0_8 = arith.constant 0 : index
    %8 = vector.load %arg6[%c0_7, %c0_8] : memref<10x32xf32, #tpu.memory_space<vmem>>, vector<10x32xf32>
    tpu.vector_store %arg6[%c0_7, %c0_8], %7 {strides = array<i32>} : memref<10x32xf32, #tpu.memory_space<vmem>>, vector<10x32xf32>,
    return
  }
  func.func @transform_0(%arg0: i32, %arg1: i32) -> (i32, i32) {
    %c0_i32 = arith.constant 0 : i32
    %c0_i32_0 = arith.constant 0 : i32
    return %arg0, %c0_i32 : i32, i32
  }
  func.func @transform_1(%arg0: i32, %arg1: i32) -> (i32, i32) {
    %c0_i32 = arith.constant 0 : i32
    %c0_i32_0 = arith.constant 0 : i32
    return %c0_i32, %arg1 : i32, i32
  }
  func.func @transform_2(%arg0: i32, %arg1: i32) -> (i32, i32) {
    %c0_i32 = arith.constant 0 : i32
    %c0_i32_0 = arith.constant 0 : i32
    return %c0_i32, %arg1 : i32, i32
  }
  func.func @transform_3(%arg0: i32, %arg1: i32) -> (i32, i32) {
    %c0_i32 = arith.constant 0 : i32
    return %arg0, %arg1 : i32, i32
  }
  func.func @transform_4(%arg0: i32, %arg1: i32) -> (i32, i32) {
    %c0_i32 = arith.constant 0 : i32
    return %arg0, %arg1 : i32, i32
  }
}

module attributes {stable_mosaic.version = 11 : i64} {
  func.func @_linear_residual_kernel(%arg0: i32, %arg1: i32, %arg2: memref<10x64xbf16, #tpu.memory_space<vmem>>, %arg3: memref<64x32xbf16, #tpu.memory_space<vmem>>, %arg4: memref<1x32xf32, #tpu.memory_space<vmem>>, %arg5: memref<10x32xf32, #tpu.memory_space<vmem>>, %arg6: memref<10x32xf32, #tpu.memory_space<vmem>>) attributes {dimension_semantics = [#tpu.dimension_semantics<parallel>, #tpu.dimension_semantics<parallel>], iteration_bounds = array<i64: 1, 1>, scalar_prefetch = 0 : i64, scratch_operands = 0 : i64, tpu.core_type = #tpu.core_type<tc>, window_params = [{transform_indices = @transform_0, window_bounds = array<i64: 10, 64>}, {transform_indices = @transform_1, window_bounds = array<i64: 64, 32>}, {transform_indices = @transform_2, window_bounds = array<i64: 1, 32>}, {transform_indices = @transform_3, window_bounds = array<i64: 10, 32>}, {transform_indices = @transform_4, window_bounds = array<i64: 10, 32>}]} {
    %c0 = arith.constant 0 : index
    %c0_0 = arith.constant 0 : index
    %0 = vector.load %arg2[%c0, %c0_0] : memref<10x64xbf16, #tpu.memory_space<vmem>>, vector<10x64xbf16>
    %c0_1 = arith.constant 0 : index
    %c0_2 = arith.constant 0 : index
    %1 = vector.load %arg3[%c0_1, %c0_2] : memref<64x32xbf16, #tpu.memory_space<vmem>>, vector<64x32xbf16>
    %cst = arith.constant dense<0.000000e+00> : vector<10x32xf32>
    %2 = tpu.matmul %0, %1, %cst {dimension_numbers = #tpu.dot_dimension_numbers<[1], [0], [0], [1], [0, 0, 1, 1], [], []>} : vector<10x64xbf16>, vector<64x32xbf16>, vector<10x32xf32> -> vector<10x32xf32>
    %c0_3 = arith.constant 0 : index
    %c0_4 = arith.constant 0 : index
    %3 = vector.load %arg5[%c0_3, %c0_4] : memref<10x32xf32, #tpu.memory_space<vmem>>, vector<10x32xf32>
    %4 = arith.addf %3, %2 : vector<10x32xf32>
    %c0_5 = arith.constant 0 : index
    %c0_6 = arith.constant 0 : index
    %5 = vector.load %arg4[%c0_5, %c0_6] : memref<1x32xf32, #tpu.memory_space<vmem>>, vector<1x32xf32>
    %6 = vector.broadcast %5 : vector<1x32xf32> to vector<10x32xf32>
    %7 = arith.addf %4, %6 : vector<10x32xf32>
    %c0_7 = arith.constant 0 : index
    %c0_8 = arith.constant 0 : index
    %8 = vector.load %arg6[%c0_7, %c0_8] : memref<10x32xf32, #tpu.memory_space<vmem>>, vector<10x32xf32>
    tpu.vector_store %arg6[%c0_7, %c0_8], %7 {strides = array<i32>} : memref<10x32xf32, #tpu.memory_space<vmem>>, vector<10x32xf32>,
    return
  }
  func.func @transform_0(%arg0: i32, %arg1: i32) -> (i32, i32) {
    %c0_i32 = arith.constant 0 : i32
    %c0_i32_0 = arith.constant 0 : i32
    return %arg0, %c0_i32 : i32, i32
  }
  func.func @transform_1(%arg0: i32, %arg1: i32) -> (i32, i32) {
    %c0_i32 = arith.constant 0 : i32
    %c0_i32_0 = arith.constant 0 : i32
    return %c0_i32, %arg1 : i32, i32
  }
  func.func @transform_2(%arg0: i32, %arg1: i32) -> (i32, i32) {
    %c0_i32 = arith.constant 0 : i32
    %c0_i32_0 = arith.constant 0 : i32
    return %c0_i32, %arg1 : i32, i32
  }
  func.func @transform_3(%arg0: i32, %arg1: i32) -> (i32, i32) {
    %c0_i32 = arith.constant 0 : i32
    return %arg0, %arg1 : i32, i32
  }
  func.func @transform_4(%arg0: i32, %arg1: i32) -> (i32, i32) {
    %c0_i32 = arith.constant 0 : i32
    return %arg0, %arg1 : i32, i32
  }
}

module attributes {stable_mosaic.version = 11 : i64} {
  func.func @_ln_linear_kernel(%arg0: i32, %arg1: i32, %arg2: memref<10x32xf32, #tpu.memory_space<vmem>>, %arg3: memref<1x32xf32, #tpu.memory_space<vmem>>, %arg4: memref<1x32xf32, #tpu.memory_space<vmem>>, %arg5: memref<32x64xbf16, #tpu.memory_space<vmem>>, %arg6: memref<1x64xf32, #tpu.memory_space<vmem>>, %arg7: memref<10x64xbf16, #tpu.memory_space<vmem>>, %arg8: memref<10x32xbf16, #tpu.memory_space<vmem>>) attributes {dimension_semantics = [#tpu.dimension_semantics<parallel>, #tpu.dimension_semantics<arbitrary>], iteration_bounds = array<i64: 1, 1>, scalar_prefetch = 0 : i64, scratch_operands = 1 : i64, tpu.core_type = #tpu.core_type<tc>, window_params = [{transform_indices = @transform_0, window_bounds = array<i64: 10, 32>}, {pipeline_mode = #tpu.pipeline_mode<synchronous>, transform_indices = @transform_1, window_bounds = array<i64: 1, 32>}, {pipeline_mode = #tpu.pipeline_mode<synchronous>, transform_indices = @transform_2, window_bounds = array<i64: 1, 32>}, {transform_indices = @transform_3, window_bounds = array<i64: 32, 64>}, {transform_indices = @transform_4, window_bounds = array<i64: 1, 64>}, {transform_indices = @transform_5, window_bounds = array<i64: 10, 64>}]} {
    %c0_i32 = arith.constant 0 : i32
    %0 = arith.cmpi eq, %arg1, %c0_i32 : i32
    %1 = arith.extui %0 : i1 to i32
    %c0_i32_0 = arith.constant 0 : i32
    %2 = arith.cmpi ne, %1, %c0_i32_0 : i32
    scf.if %2 {
      %c0_11 = arith.constant 0 : index
      %c0_12 = arith.constant 0 : index
      %19 = vector.load %arg2[%c0_11, %c0_12] : memref<10x32xf32, #tpu.memory_space<vmem>>, vector<10x32xf32>
      %cst_13 = arith.constant dense<0.000000e+00> : vector<10xf32>
      %20 = vector.multi_reduction <add>, %19, %cst_13 [1] : vector<10x32xf32> to vector<10xf32>
      %21 = vector.shape_cast %20 : vector<10xf32> to vector<10x1xf32>
      %cst_14 = arith.constant 3.200000e+01 : f32
      %22 = vector.broadcast %cst_14 : f32 to vector<10x1xf32>
      %23 = arith.divf %21, %22 : vector<10x1xf32>
      %24 = vector.broadcast %23 : vector<10x1xf32> to vector<10x32xf32>
      %25 = arith.subf %19, %24 : vector<10x32xf32>
      %26 = arith.mulf %25, %25 : vector<10x32xf32>
      %cst_15 = arith.constant dense<0.000000e+00> : vector<10xf32>
      %27 = vector.multi_reduction <add>, %26, %cst_15 [1] : vector<10x32xf32> to vector<10xf32>
      %28 = vector.shape_cast %27 : vector<10xf32> to vector<10x1xf32>
      %cst_16 = arith.constant 3.200000e+01 : f32
      %29 = vector.broadcast %cst_16 : f32 to vector<10x1xf32>
      %30 = arith.divf %28, %29 : vector<10x1xf32>
      %31 = vector.broadcast %23 : vector<10x1xf32> to vector<10x32xf32>
      %32 = arith.subf %19, %31 : vector<10x32xf32>
      %cst_17 = arith.constant 9.99999974E-6 : f32
      %33 = vector.broadcast %cst_17 : f32 to vector<10x1xf32>
      %34 = arith.addf %30, %33 : vector<10x1xf32>
      %35 = math.rsqrt %34 : vector<10x1xf32>
      %36 = vector.broadcast %35 : vector<10x1xf32> to vector<10x32xf32>
      %37 = arith.mulf %32, %36 : vector<10x32xf32>
      %c0_18 = arith.constant 0 : index
      %c0_19 = arith.constant 0 : index
      %38 = vector.load %arg3[%c0_18, %c0_19] : memref<1x32xf32, #tpu.memory_space<vmem>>, vector<1x32xf32>
      %39 = vector.broadcast %38 : vector<1x32xf32> to vector<10x32xf32>
      %40 = arith.mulf %37, %39 : vector<10x32xf32>
      %c0_20 = arith.constant 0 : index
      %c0_21 = arith.constant 0 : index
      %41 = vector.load %arg4[%c0_20, %c0_21] : memref<1x32xf32, #tpu.memory_space<vmem>>, vector<1x32xf32>
      %42 = vector.broadcast %41 : vector<1x32xf32> to vector<10x32xf32>
      %43 = arith.addf %40, %42 : vector<10x32xf32>
      %44 = arith.truncf %43 : vector<10x32xf32> to vector<10x32xbf16>
      %c0_22 = arith.constant 0 : index
      %c0_23 = arith.constant 0 : index
      %45 = vector.load %arg8[%c0_22, %c0_23] : memref<10x32xbf16, #tpu.memory_space<vmem>>, vector<10x32xbf16>
      tpu.vector_store %arg8[%c0_22, %c0_23], %44 {strides = array<i32>} : memref<10x32xbf16, #tpu.memory_space<vmem>>, vector<10x32xbf16>,
    } else {
    }
    %c0 = arith.constant 0 : index
    %c0_1 = arith.constant 0 : index
    %3 = vector.load %arg8[%c0, %c0_1] : memref<10x32xbf16, #tpu.memory_space<vmem>>, vector<10x32xbf16>
    %c0_2 = arith.constant 0 : index
    %c0_3 = arith.constant 0 : index
    %4 = vector.load %arg5[%c0_2, %c0_3] : memref<32x64xbf16, #tpu.memory_space<vmem>>, vector<32x64xbf16>
    %cst = arith.constant dense<0.000000e+00> : vector<10x64xf32>
    %5 = tpu.matmul %3, %4, %cst {dimension_numbers = #tpu.dot_dimension_numbers<[1], [0], [0], [1], [0, 0, 1, 1], [], []>} : vector<10x32xbf16>, vector<32x64xbf16>, vector<10x64xf32> -> vector<10x64xf32>
    %c0_4 = arith.constant 0 : index
    %c0_5 = arith.constant 0 : index
    %6 = vector.load %arg6[%c0_4, %c0_5] : memref<1x64xf32, #tpu.memory_space<vmem>>, vector<1x64xf32>
    %7 = vector.broadcast %6 : vector<1x64xf32> to vector<10x64xf32>
    %8 = arith.addf %5, %7 : vector<10x64xf32>
    %cst_6 = arith.constant 5.000000e-01 : f32
    %9 = vector.broadcast %cst_6 : f32 to vector<10x64xf32>
    %10 = arith.mulf %9, %8 : vector<10x64xf32>
    %cst_7 = arith.constant 0.707106769 : f32
    %11 = vector.broadcast %cst_7 : f32 to vector<10x64xf32>
    %12 = arith.mulf %8, %11 : vector<10x64xf32>
    %13 = math.erf %12 : vector<10x64xf32>
    %cst_8 = arith.constant 1.000000e+00 : f32
    %14 = vector.broadcast %cst_8 : f32 to vector<10x64xf32>
    %15 = arith.addf %14, %13 : vector<10x64xf32>
    %16 = arith.mulf %10, %15 : vector<10x64xf32>
    %17 = arith.truncf %16 : vector<10x64xf32> to vector<10x64xbf16>
    %c0_9 = arith.constant 0 : index
    %c0_10 = arith.constant 0 : index
    %18 = vector.load %arg7[%c0_9, %c0_10] : memref<10x64xbf16, #tpu.memory_space<vmem>>, vector<10x64xbf16>
    tpu.vector_store %arg7[%c0_9, %c0_10], %17 {strides = array<i32>} : memref<10x64xbf16, #tpu.memory_space<vmem>>, vector<10x64xbf16>,
    return
  }
  func.func @transform_0(%arg0: i32, %arg1: i32) -> (i32, i32) {
    %c0_i32 = arith.constant 0 : i32
    %c0_i32_0 = arith.constant 0 : i32
    return %arg0, %c0_i32 : i32, i32
  }
  func.func @transform_1(%arg0: i32, %arg1: i32) -> (i32, i32) {
    %c0_i32 = arith.constant 0 : i32
    %c0_i32_0 = arith.constant 0 : i32
    %c0_i32_1 = arith.constant 0 : i32
    return %c0_i32, %c0_i32_0 : i32, i32
  }
  func.func @transform_2(%arg0: i32, %arg1: i32) -> (i32, i32) {
    %c0_i32 = arith.constant 0 : i32
    %c0_i32_0 = arith.constant 0 : i32
    %c0_i32_1 = arith.constant 0 : i32
    return %c0_i32, %c0_i32_0 : i32, i32
  }
  func.func @transform_3(%arg0: i32, %arg1: i32) -> (i32, i32) {
    %c0_i32 = arith.constant 0 : i32
    %c0_i32_0 = arith.constant 0 : i32
    return %c0_i32, %arg1 : i32, i32
  }
  func.func @transform_4(%arg0: i32, %arg1: i32) -> (i32, i32) {
    %c0_i32 = arith.constant 0 : i32
    %c0_i32_0 = arith.constant 0 : i32
    return %c0_i32, %arg1 : i32, i32
  }
  func.func @transform_5(%arg0: i32, %arg1: i32) -> (i32, i32) {
    %c0_i32 = arith.constant 0 : i32
    return %arg0, %arg1 : i32, i32
  }
}

module attributes {stable_mosaic.version = 11 : i64} {
  func.func @_ln_linear_kernel(%arg0: i32, %arg1: i32, %arg2: memref<2x32xf32, #tpu.memory_space<vmem>>, %arg3: memref<1x32xf32, #tpu.memory_space<vmem>>, %arg4: memref<1x32xf32, #tpu.memory_space<vmem>>, %arg5: memref<32x10xbf16, #tpu.memory_space<vmem>>, %arg6: memref<1x10xf32, #tpu.memory_space<vmem>>, %arg7: memref<2x10xf32, #tpu.memory_space<vmem>>, %arg8: memref<2x32xbf16, #tpu.memory_space<vmem>>) attributes {dimension_semantics = [#tpu.dimension_semantics<parallel>, #tpu.dimension_semantics<arbitrary>], iteration_bounds = array<i64: 1, 1>, scalar_prefetch = 0 : i64, scratch_operands = 1 : i64, tpu.core_type = #tpu.core_type<tc>, window_params = [{transform_indices = @transform_0, window_bounds = array<i64: 2, 32>}, {pipeline_mode = #tpu.pipeline_mode<synchronous>, transform_indices = @transform_1, window_bounds = array<i64: 1, 32>}, {pipeline_mode = #tpu.pipeline_mode<synchronous>, transform_indices = @transform_2, window_bounds = array<i64: 1, 32>}, {transform_indices = @transform_3, window_bounds = array<i64: 32, 10>}, {transform_indices = @transform_4, window_bounds = array<i64: 1, 10>}, {transform_indices = @transform_5, window_bounds = array<i64: 2, 10>}]} {
    %c0_i32 = arith.constant 0 : i32
    %0 = arith.cmpi eq, %arg1, %c0_i32 : i32
    %1 = arith.extui %0 : i1 to i32
    %c0_i32_0 = arith.constant 0 : i32
    %2 = arith.cmpi ne, %1, %c0_i32_0 : i32
    scf.if %2 {
      %c0_8 = arith.constant 0 : index
      %c0_9 = arith.constant 0 : index
      %10 = vector.load %arg2[%c0_8, %c0_9] : memref<2x32xf32, #tpu.memory_space<vmem>>, vector<2x32xf32>
      %cst_10 = arith.constant dense<0.000000e+00> : vector<2xf32>
      %11 = vector.multi_reduction <add>, %10, %cst_10 [1] : vector<2x32xf32> to vector<2xf32>
      %12 = vector.shape_cast %11 : vector<2xf32> to vector<2x1xf32>
      %cst_11 = arith.constant 3.200000e+01 : f32
      %13 = vector.broadcast %cst_11 : f32 to vector<2x1xf32>
      %14 = arith.divf %12, %13 : vector<2x1xf32>
      %15 = vector.broadcast %14 : vector<2x1xf32> to vector<2x32xf32>
      %16 = arith.subf %10, %15 : vector<2x32xf32>
      %17 = arith.mulf %16, %16 : vector<2x32xf32>
      %cst_12 = arith.constant dense<0.000000e+00> : vector<2xf32>
      %18 = vector.multi_reduction <add>, %17, %cst_12 [1] : vector<2x32xf32> to vector<2xf32>
      %19 = vector.shape_cast %18 : vector<2xf32> to vector<2x1xf32>
      %cst_13 = arith.constant 3.200000e+01 : f32
      %20 = vector.broadcast %cst_13 : f32 to vector<2x1xf32>
      %21 = arith.divf %19, %20 : vector<2x1xf32>
      %22 = vector.broadcast %14 : vector<2x1xf32> to vector<2x32xf32>
      %23 = arith.subf %10, %22 : vector<2x32xf32>
      %cst_14 = arith.constant 9.99999974E-6 : f32
      %24 = vector.broadcast %cst_14 : f32 to vector<2x1xf32>
      %25 = arith.addf %21, %24 : vector<2x1xf32>
      %26 = math.rsqrt %25 : vector<2x1xf32>
      %27 = vector.broadcast %26 : vector<2x1xf32> to vector<2x32xf32>
      %28 = arith.mulf %23, %27 : vector<2x32xf32>
      %c0_15 = arith.constant 0 : index
      %c0_16 = arith.constant 0 : index
      %29 = vector.load %arg3[%c0_15, %c0_16] : memref<1x32xf32, #tpu.memory_space<vmem>>, vector<1x32xf32>
      %30 = vector.broadcast %29 : vector<1x32xf32> to vector<2x32xf32>
      %31 = arith.mulf %28, %30 : vector<2x32xf32>
      %c0_17 = arith.constant 0 : index
      %c0_18 = arith.constant 0 : index
      %32 = vector.load %arg4[%c0_17, %c0_18] : memref<1x32xf32, #tpu.memory_space<vmem>>, vector<1x32xf32>
      %33 = vector.broadcast %32 : vector<1x32xf32> to vector<2x32xf32>
      %34 = arith.addf %31, %33 : vector<2x32xf32>
      %35 = arith.truncf %34 : vector<2x32xf32> to vector<2x32xbf16>
      %c0_19 = arith.constant 0 : index
      %c0_20 = arith.constant 0 : index
      %36 = vector.load %arg8[%c0_19, %c0_20] : memref<2x32xbf16, #tpu.memory_space<vmem>>, vector<2x32xbf16>
      tpu.vector_store %arg8[%c0_19, %c0_20], %35 {strides = array<i32>} : memref<2x32xbf16, #tpu.memory_space<vmem>>, vector<2x32xbf16>,
    } else {
    }
    %c0 = arith.constant 0 : index
    %c0_1 = arith.constant 0 : index
    %3 = vector.load %arg8[%c0, %c0_1] : memref<2x32xbf16, #tpu.memory_space<vmem>>, vector<2x32xbf16>
    %c0_2 = arith.constant 0 : index
    %c0_3 = arith.constant 0 : index
    %4 = vector.load %arg5[%c0_2, %c0_3] : memref<32x10xbf16, #tpu.memory_space<vmem>>, vector<32x10xbf16>
    %cst = arith.constant dense<0.000000e+00> : vector<2x10xf32>
    %5 = tpu.matmul %3, %4, %cst {dimension_numbers = #tpu.dot_dimension_numbers<[1], [0], [0], [1], [0, 0, 1, 1], [], []>} : vector<2x32xbf16>, vector<32x10xbf16>, vector<2x10xf32> -> vector<2x10xf32>
    %c0_4 = arith.constant 0 : index
    %c0_5 = arith.constant 0 : index
    %6 = vector.load %arg6[%c0_4, %c0_5] : memref<1x10xf32, #tpu.memory_space<vmem>>, vector<1x10xf32>
    %7 = vector.broadcast %6 : vector<1x10xf32> to vector<2x10xf32>
    %8 = arith.addf %5, %7 : vector<2x10xf32>
    %c0_6 = arith.constant 0 : index
    %c0_7 = arith.constant 0 : index
    %9 = vector.load %arg7[%c0_6, %c0_7] : memref<2x10xf32, #tpu.memory_space<vmem>>, vector<2x10xf32>
    tpu.vector_store %arg7[%c0_6, %c0_7], %8 {strides = array<i32>} : memref<2x10xf32, #tpu.memory_space<vmem>>, vector<2x10xf32>,
    return
  }
  func.func @transform_0(%arg0: i32, %arg1: i32) -> (i32, i32) {
    %c0_i32 = arith.constant 0 : i32
    %c0_i32_0 = arith.constant 0 : i32
    return %arg0, %c0_i32 : i32, i32
  }
  func.func @transform_1(%arg0: i32, %arg1: i32) -> (i32, i32) {
    %c0_i32 = arith.constant 0 : i32
    %c0_i32_0 = arith.constant 0 : i32
    %c0_i32_1 = arith.constant 0 : i32
    return %c0_i32, %c0_i32_0 : i32, i32
  }
  func.func @transform_2(%arg0: i32, %arg1: i32) -> (i32, i32) {
    %c0_i32 = arith.constant 0 : i32
    %c0_i32_0 = arith.constant 0 : i32
    %c0_i32_1 = arith.constant 0 : i32
    return %c0_i32, %c0_i32_0 : i32, i32
  }
  func.func @transform_3(%arg0: i32, %arg1: i32) -> (i32, i32) {
    %c0_i32 = arith.constant 0 : i32
    %c0_i32_0 = arith.constant 0 : i32
    return %c0_i32, %arg1 : i32, i32
  }
  func.func @transform_4(%arg0: i32, %arg1: i32) -> (i32, i32) {
    %c0_i32 = arith.constant 0 : i32
    %c0_i32_0 = arith.constant 0 : i32
    return %c0_i32, %arg1 : i32, i32
  }
  func.func @transform_5(%arg0: i32, %arg1: i32) -> (i32, i32) {
    %c0_i32 = arith.constant 0 : i32
    return %arg0, %arg1 : i32, i32
  }
}

</mosaic_0001>

<llo_original>
// kernel: vit_forward.13
$region0: #{vit_forward.13}
  #allocation0 [shape = 'u32[]', space=smem, size = 0x4, offset = 0x4, fixed_abs, tag = 'smem constant byte address 0x4 - core index']
  #allocation1 [shape = 'u32[144,128]{1,0:T(1,128)}', space=vmem, size = 0x12000, scoped, tag = 'internal scratch']
  #allocation2 [shape = 'bf16[10,32]{1,0:T(8,128)(2,1)}', space=vmem, size = 0x1000, scoped, tag = 'scratch operand']
  %s0 = inlined_call_operand.vmem [shape: f32[10,32], index: 0, kind: input, shape index: {}]
  %s1 = inlined_call_operand.vmem [shape: f32[1,32], index: 1, kind: input, shape index: {}]
  %s2 = inlined_call_operand.vmem [shape: f32[1,32], index: 2, kind: input, shape index: {}]
  %s3 = inlined_call_operand.vmem [shape: bf16[32,96], index: 3, kind: input, shape index: {}]
  %s4 = inlined_call_operand.vmem [shape: f32[1,96], index: 4, kind: input, shape index: {}]
  %s5 = inlined_call_operand.vmem [shape: bf16[10,96], index: 5, kind: output, shape index: {}]
  %s6 = sld [smem:[#allocation0]]
  $region34: #{vit_forward.13} parent=0
    _
  %s8 = ssub.s32 1, %s6
  %s9 = scalar_select 0, %s8, %s6
  // Predicated region
  $region2: #{vit_forward.13} parent=0 // pred_check
    _
  $region3: #{vit_forward.13} parent=0 // pred_check_branch
    %11 = sbr.rel (0) target = $region5
  $region4: #{vit_forward.13} parent=0 // pred_region
    _
  $region5: #{vit_forward.13} parent=0 // pred_fallthru
    _
  // Predicated region
  $region6: #{vit_forward.13} parent=0 // pred_check
    _
  $region7: #{vit_forward.13} parent=0 // pred_check_branch
    %13 = sbr.rel (0) target = $region9
  $region8: #{vit_forward.13} parent=0 // pred_region
    _
  $region9: #{vit_forward.13} parent=0 // pred_fallthru
    _
  // Predicated region
  $region10: #{vit_forward.13} parent=0 // pred_check
    _
  $region11: #{vit_forward.13} parent=0 // pred_check_branch
    %15 = sbr.rel (0) target = $region13
  $region12: #{vit_forward.13} parent=0 // pred_region
    _
  $region13: #{vit_forward.13} parent=0 // pred_fallthru
    _
  // Predicated region
  $region14: #{vit_forward.13} parent=0 // pred_check
    _
  $region15: #{vit_forward.13} parent=0 // pred_check_branch
    %17 = sbr.rel (0) target = $region17
  $region16: #{vit_forward.13} parent=0 // pred_region
    _
  $region17: #{vit_forward.13} parent=0 // pred_fallthru
    _
  // Predicated region
  $region18: #{vit_forward.13} parent=0 // pred_check
    _
  $region19: #{vit_forward.13} parent=0 // pred_check_branch
    %19 = sbr.rel (0) target = $region21
  $region20: #{vit_forward.13} parent=0 // pred_region
    _
  $region21: #{vit_forward.13} parent=0 // pred_fallthru
    _
  %p21 = scmp.eq.s32.totalorder 0, 0
  // Predicated region
  $region22: #{vit_forward.13} parent=0 // pred_check
    %p22 = pneg %p21
  $region23: #{vit_forward.13} parent=0 // pred_check_branch
    %24 = sbr.rel (%p22) target = $region25
  $region24: #{vit_forward.13} parent=0 // pred_region
    %v25 = vld [vmem:[%s0] sm:$0xff]
    %v26 = vld [vmem:[%s0 + $0x8] sm:$0x3]
    %vm27 = vcmask 261120
    %v28 = vsel %vm27, %v25, 0.0
    %29 = vadd.xlane.f32.xlu0 %v28
    %v30 = vpop.xlane.xlu0 %29
    %vm31 = vcmask 254976
    %v32 = vsel %vm31, %v26, 0.0
    %33 = vadd.xlane.f32.xlu0 %v32
    %v34 = vpop.xlane.xlu0 %33
    %v35 = vrcp.pop 32.0
    %v36 = vmul.f32 %v30, %v35
    %v37 = vmul.f32 %v34, %v35
    %v38 = vsub.f32 %v25, %v36
    %v39 = vsub.f32 %v26, %v37
    %v40 = vmul.f32 %v38, %v38
    %v41 = vmul.f32 %v39, %v39
    %v42 = vsel %vm27, %v40, 0.0
    %43 = vadd.xlane.f32.xlu0 %v42
    %v44 = vpop.xlane.xlu0 %43
    %v45 = vsel %vm31, %v41, 0.0
    %46 = vadd.xlane.f32.xlu0 %v45
    %v47 = vpop.xlane.xlu0 %46
    %v48 = vmul.f32 %v44, %v35
    %v49 = vmul.f32 %v47, %v35
    %v50 = vadd.f32 %v48, 1e-05
    %v51 = vadd.f32 %v49, 1e-05
    %v52 = vrsqrt.pop %v50
    %v53 = vrsqrt.pop %v51
    %v54 = vmul.f32 %v38, %v52
    %v55 = vmul.f32 %v39, %v53
    %v56 = vld [vmem:[%s1] sm:$0x1]
    %v58 = vlaneseq
    %v59 = vshrl.u32 %v58, 7
    %v60 = vsub.s32 0, %v59
    %v61 = vrot.slane %v56, %v60
    %v63 = vmul.f32 %v54, %v61
    %v64 = vmul.f32 %v55, %v61
    %v65 = vld [vmem:[%s2] sm:$0x1]
    %v67 = vlaneseq
    %v68 = vshrl.u32 %v67, 7
    %v69 = vsub.s32 0, %v68
    %v70 = vrot.slane %v65, %v69
    %v72 = vadd.f32 %v63, %v70
    %v73 = vadd.f32 %v64, %v70
    %v74 = vpack.c.bf16 %v73, %v72
    %v76 = vunpack.c.l.b16 %v74
    %v77 = vunpack.c.h.b16 %v74
    %v78 = vpack.c.b16 %v76, %v76
    %v79 = vpack.c.b16 %v77, %v77
    %vm82 = vcmask 257024
    %83 = vst.msk [vmem:[#allocation2] sm:$0xf] %vm82, %v78
    %vm84 = vcmask 253952
    %85 = vst.msk [vmem:[#allocation2 + $0x4] sm:$0x1] %vm84, %v79
  $region25: #{vit_forward.13} parent=0 // pred_fallthru
    _
  %v86 = vld [vmem:[#allocation2] sm:$0xf]
  %v87 = vld [vmem:[#allocation2 + $0x4] sm:$0x1]
  %v88 = vld [vmem:[%s3] sm:$0xf]
  %v89 = vld [vmem:[%s3 + $0x4] sm:$0xf]
  %v90 = vld [vmem:[%s3 + $0x8] sm:$0xf]
  %v91 = vld [vmem:[%s3 + $0xc] sm:$0xf]
  %v92 = vld [vmem:[%s4] sm:$0x1]
  %v94 = vlaneseq
  %v95 = vshrl.u32 %v94, 7
  %v96 = vsub.s32 0, %v95
  %v97 = vrot.slane %v92, %v96
  %v101 = vunpack.c.l.b16 %v86
  %v102 = vunpack.c.l.b16 %v87
  %v103 = vpack.c.b16 %v102, %v101
  %v108 = vunpack.c.l.b16 %v88
  %v109 = vunpack.c.l.b16 %v89
  %v110 = vunpack.c.l.b16 %v90
  %v111 = vunpack.c.l.b16 %v91
  %v112 = vpack.c.b16 %v109, %v108
  %v113 = vpack.c.b16 %v111, %v110
  %vm116 = vcmask 261120
  %v118 = vsel %vm116, %v103, 0
  %120 = vmatprep.subr.bf16.mxu0 0
  %121 = vmatpush1.bf16.msra.mxu0 %v112
  %122 = vmatprep.subr.bf16.mxu0 0
  %123 = vmatpush1.bf16.msra.mxu0 %v113
  %124 = vmatprep.subr.bf16.mxu0 0
  %125 = vmatpush1.bf16.msra.mxu0 0
  %126 = vmatprep.subr.bf16.mxu0 0
  %127 = vmatpush1.bf16.msra.mxu0 0
  %128 = vmatprep.subr.bf16.mxu0 0
  %129 = vmatpush1.bf16.msra.mxu0 0
  %130 = vmatprep.subr.bf16.mxu0 0
  %131 = vmatpush1.bf16.msra.mxu0 0
  %132 = vmatprep.subr.bf16.mxu0 0
  %133 = vmatpush1.bf16.msra.mxu0 0
  %134 = vmatprep.subr.bf16.mxu0 0
  %135 = vmatpush1.bf16.msra.mxu0 0
  %136 = vmatprep.subr.bf16.mxu0 0
  %137 = vmatpush1.bf16.msra.mxu0 0
  %138 = vmatprep.subr.bf16.mxu0 0
  %139 = vmatpush1.bf16.msra.mxu0 0
  %140 = vmatprep.subr.bf16.mxu0 0
  %141 = vmatpush1.bf16.msra.mxu0 0
  %142 = vmatprep.subr.bf16.mxu0 0
  %143 = vmatpush1.bf16.msra.mxu0 0
  %144 = vmatprep.subr.bf16.mxu0 0
  %145 = vmatpush1.bf16.msra.mxu0 0
  %146 = vmatprep.subr.bf16.mxu0 0
  %147 = vmatpush1.bf16.msra.mxu0 0
  %148 = vmatprep.subr.bf16.mxu0 0
  %149 = vmatpush1.bf16.msra.mxu0 0
  %150 = vmatprep.subr.bf16.mxu0 0
  %151 = vmatpush1.bf16.msra.mxu0 0
  %152 = vmatprep.mubr.bf16.mxu0 0
  %153 = vmatmul.mubr.bf16.gmra.mrb[0].mxu0 %v118
  %v154 = vpop.f32.mrb[0].mxu0
  %v155 = vadd.f32 %v97, %v154
  %v156 = vpop.f32.mrb[0].mxu0
  %v157 = vpop.f32.mrb[0].mxu0
  %v158 = vadd.f32 %v97, %v157
  %v159 = vpop.f32.mrb[0].mxu0
  %160 = vdwg.mxu0
  %v161 = vpack.c.bf16 %v158, %v155
  %v163 = vunpack.c.l.b16 %v161
  %v164 = vunpack.c.h.b16 %v161
  %v165 = vpack.c.b16 %v163, %v163
  %v166 = vpack.c.b16 %v164, %v164
  %vm169 = vcmask 781312
  %170 = vst.msk [vmem:[%s5] sm:$0xf] %vm169, %v165
  %vm171 = vcmask 778240
  %172 = vst.msk [vmem:[%s5 + $0x4] sm:$0x1] %vm171, %v166
  // Predicated region
  $region26: #{vit_forward.13} parent=0 // pred_check
    _
  $region27: #{vit_forward.13} parent=0 // pred_check_branch
    %174 = sbr.rel (0) target = $region29
  $region28: #{vit_forward.13} parent=0 // pred_region
    _
  $region29: #{vit_forward.13} parent=0 // pred_fallthru
    _
  // Predicated region
  $region30: #{vit_forward.13} parent=0 // pred_check
    _
  $region31: #{vit_forward.13} parent=0 // pred_check_branch
    %176 = sbr.rel (0) target = $region33
  $region32: #{vit_forward.13} parent=0 // pred_region
    _
  $region33: #{vit_forward.13} parent=0 // pred_fallthru
    _

// kernel: vit_forward.15
$region0: #{vit_forward.15}
  #allocation0 [shape = 'u32[]', space=smem, size = 0x4, offset = 0x4, fixed_abs, tag = 'smem constant byte address 0x4 - core index']
  #allocation1 [shape = 'u32[144,128]{1,0:T(1,128)}', space=vmem, size = 0x12000, scoped, tag = 'internal scratch']
  %s0 = inlined_call_operand.vmem [shape: bf16[10,32], index: 0, kind: input, shape index: {}]
  %s1 = inlined_call_operand.vmem [shape: bf16[32,32], index: 1, kind: input, shape index: {}]
  %s2 = inlined_call_operand.vmem [shape: f32[1,32], index: 2, kind: input, shape index: {}]
  %s3 = inlined_call_operand.vmem [shape: f32[10,32], index: 3, kind: input, shape index: {}]
  %s4 = inlined_call_operand.vmem [shape: f32[10,32], index: 4, kind: output, shape index: {}]
  %s5 = sld [smem:[#allocation0]]
  $region26: #{vit_forward.15} parent=0
    _
  %s7 = ssub.s32 1, %s5
  %s8 = scalar_select 0, %s7, %s5
  // Predicated region
  $region2: #{vit_forward.15} parent=0 // pred_check
    _
  $region3: #{vit_forward.15} parent=0 // pred_check_branch
    %10 = sbr.rel (0) target = $region5
  $region4: #{vit_forward.15} parent=0 // pred_region
    _
  $region5: #{vit_forward.15} parent=0 // pred_fallthru
    _
  // Predicated region
  $region6: #{vit_forward.15} parent=0 // pred_check
    _
  $region7: #{vit_forward.15} parent=0 // pred_check_branch
    %12 = sbr.rel (0) target = $region9
  $region8: #{vit_forward.15} parent=0 // pred_region
    _
  $region9: #{vit_forward.15} parent=0 // pred_fallthru
    _
  // Predicated region
  $region10: #{vit_forward.15} parent=0 // pred_check
    _
  $region11: #{vit_forward.15} parent=0 // pred_check_branch
    %14 = sbr.rel (0) target = $region13
  $region12: #{vit_forward.15} parent=0 // pred_region
    _
  $region13: #{vit_forward.15} parent=0 // pred_fallthru
    _
  // Predicated region
  $region14: #{vit_forward.15} parent=0 // pred_check
    _
  $region15: #{vit_forward.15} parent=0 // pred_check_branch
    %16 = sbr.rel (0) target = $region17
  $region16: #{vit_forward.15} parent=0 // pred_region
    _
  $region17: #{vit_forward.15} parent=0 // pred_fallthru
    _
  %v18 = vld [vmem:[%s0] sm:$0xf]
  %v19 = vld [vmem:[%s0 + $0x4] sm:$0x1]
  %v20 = vld [vmem:[%s1] sm:$0xf]
  %v21 = vld [vmem:[%s1 + $0x4] sm:$0xf]
  %v22 = vld [vmem:[%s1 + $0x8] sm:$0xf]
  %v23 = vld [vmem:[%s1 + $0xc] sm:$0xf]
  %v26 = vunpack.c.l.b16 %v18
  %v27 = vunpack.c.l.b16 %v19
  %v28 = vpack.c.b16 %v27, %v26
  %v33 = vunpack.c.l.b16 %v20
  %v34 = vunpack.c.l.b16 %v21
  %v35 = vunpack.c.l.b16 %v22
  %v36 = vunpack.c.l.b16 %v23
  %v37 = vpack.c.b16 %v34, %v33
  %v38 = vpack.c.b16 %v36, %v35
  %vm41 = vcmask 261120
  %v43 = vsel %vm41, %v28, 0
  %45 = vmatprep.subr.bf16.mxu0 0
  %46 = vmatpush1.bf16.msra.mxu0 %v37
  %47 = vmatprep.subr.bf16.mxu0 0
  %48 = vmatpush1.bf16.msra.mxu0 %v38
  %49 = vmatprep.subr.bf16.mxu0 0
  %50 = vmatpush1.bf16.msra.mxu0 0
  %51 = vmatprep.subr.bf16.mxu0 0
  %52 = vmatpush1.bf16.msra.mxu0 0
  %53 = vmatprep.subr.bf16.mxu0 0
  %54 = vmatpush1.bf16.msra.mxu0 0
  %55 = vmatprep.subr.bf16.mxu0 0
  %56 = vmatpush1.bf16.msra.mxu0 0
  %57 = vmatprep.subr.bf16.mxu0 0
  %58 = vmatpush1.bf16.msra.mxu0 0
  %59 = vmatprep.subr.bf16.mxu0 0
  %60 = vmatpush1.bf16.msra.mxu0 0
  %61 = vmatprep.subr.bf16.mxu0 0
  %62 = vmatpush1.bf16.msra.mxu0 0
  %63 = vmatprep.subr.bf16.mxu0 0
  %64 = vmatpush1.bf16.msra.mxu0 0
  %65 = vmatprep.subr.bf16.mxu0 0
  %66 = vmatpush1.bf16.msra.mxu0 0
  %67 = vmatprep.subr.bf16.mxu0 0
  %68 = vmatpush1.bf16.msra.mxu0 0
  %69 = vmatprep.subr.bf16.mxu0 0
  %70 = vmatpush1.bf16.msra.mxu0 0
  %71 = vmatprep.subr.bf16.mxu0 0
  %72 = vmatpush1.bf16.msra.mxu0 0
  %73 = vmatprep.subr.bf16.mxu0 0
  %74 = vmatpush1.bf16.msra.mxu0 0
  %75 = vmatprep.subr.bf16.mxu0 0
  %76 = vmatpush1.bf16.msra.mxu0 0
  %77 = vmatprep.mubr.bf16.mxu0 0
  %78 = vmatmul.mubr.bf16.gmra.mrb[0].mxu0 %v43
  %v79 = vpop.f32.mrb[0].mxu0
  %v80 = vadd.f32 0.0, %v79
  %v81 = vpop.f32.mrb[0].mxu0
  %v82 = vpop.f32.mrb[0].mxu0
  %v83 = vadd.f32 0.0, %v82
  %v84 = vpop.f32.mrb[0].mxu0
  %85 = vdwg.mxu0
  %v86 = vld [vmem:[%s3] sm:$0xff]
  %v87 = vld [vmem:[%s3 + $0x8] sm:$0x3]
  %v88 = vadd.f32 %v86, %v80
  %v89 = vadd.f32 %v87, %v83
  %v90 = vld [vmem:[%s2] sm:$0x1]
  %v92 = vlaneseq
  %v93 = vshrl.u32 %v92, 7
  %v94 = vsub.s32 0, %v93
  %v95 = vrot.slane %v90, %v94
  %v97 = vadd.f32 %v88, %v95
  %v98 = vadd.f32 %v89, %v95
  %99 = vst.msk [vmem:[%s4] sm:$0xff] %vm41, %v97
  %vm100 = vcmask 254976
  %101 = vst.msk [vmem:[%s4 + $0x8] sm:$0x3] %vm100, %v98
  // Predicated region
  $region18: #{vit_forward.15} parent=0 // pred_check
    _
  $region19: #{vit_forward.15} parent=0 // pred_check_branch
    %103 = sbr.rel (0) target = $region21
  $region20: #{vit_forward.15} parent=0 // pred_region
    _
  $region21: #{vit_forward.15} parent=0 // pred_fallthru
    _
  // Predicated region
  $region22: #{vit_forward.15} parent=0 // pred_check
    _
  $region23: #{vit_forward.15} parent=0 // pred_check_branch
    %105 = sbr.rel (0) target = $region25
  $region24: #{vit_forward.15} parent=0 // pred_region
    _
  $region25: #{vit_forward.15} parent=0 // pred_fallthru
    _

// kernel: vit_forward.12
$region0: #{vit_forward.12}
  #allocation0 [shape = 'u32[]', space=smem, size = 0x4, offset = 0x4, fixed_abs, tag = 'smem constant byte address 0x4 - core index']
  #allocation1 [shape = 'u32[144,128]{1,0:T(1,128)}', space=vmem, size = 0x12000, scoped, tag = 'internal scratch']
  %s0 = inlined_call_operand.vmem [shape: f32[8,256], index: 0, kind: input, shape index: {}]
  %s1 = inlined_call_operand.vmem [shape: bf16[256,32], index: 1, kind: input, shape index: {}]
  %s2 = inlined_call_operand.vmem [shape: f32[1,32], index: 2, kind: input, shape index: {}]
  %s3 = inlined_call_operand.vmem [shape: f32[8,32], index: 3, kind: output, shape index: {}]
  %s4 = sld [smem:[#allocation0]]
  $region22: #{vit_forward.12} parent=0
    _
  %s6 = ssub.s32 1, %s4
  %s7 = scalar_select 0, %s6, %s4
  // Predicated region
  $region2: #{vit_forward.12} parent=0 // pred_check
    _
  $region3: #{vit_forward.12} parent=0 // pred_check_branch
    %9 = sbr.rel (0) target = $region5
  $region4: #{vit_forward.12} parent=0 // pred_region
    _
  $region5: #{vit_forward.12} parent=0 // pred_fallthru
    _
  // Predicated region
  $region6: #{vit_forward.12} parent=0 // pred_check
    _
  $region7: #{vit_forward.12} parent=0 // pred_check_branch
    %11 = sbr.rel (0) target = $region9
  $region8: #{vit_forward.12} parent=0 // pred_region
    _
  $region9: #{vit_forward.12} parent=0 // pred_fallthru
    _
  // Predicated region
  $region10: #{vit_forward.12} parent=0 // pred_check
    _
  $region11: #{vit_forward.12} parent=0 // pred_check_branch
    %13 = sbr.rel (0) target = $region13
  $region12: #{vit_forward.12} parent=0 // pred_region
    _
  $region13: #{vit_forward.12} parent=0 // pred_fallthru
    _
  %v15 = vld [vmem:[%s0] sm:$0xff]
  %v16 = vld [vmem:[%s0 + $0x8] sm:$0xff]
  %v17 = vpack.c.bf16 %v15, %v15
  %v18 = vpack.c.bf16 %v16, %v16
  %v19 = vld [vmem:[%s1] sm:$0xf]
  %v20 = vld [vmem:[%s1 + $0x4] sm:$0xf]
  %v21 = vld [vmem:[%s1 + $0x8] sm:$0xf]
  %v22 = vld [vmem:[%s1 + $0xc] sm:$0xf]
  %v23 = vld [vmem:[%s1 + $0x10] sm:$0xf]
  %v24 = vld [vmem:[%s1 + $0x14] sm:$0xf]
  %v25 = vld [vmem:[%s1 + $0x18] sm:$0xf]
  %v26 = vld [vmem:[%s1 + $0x1c] sm:$0xf]
  %v27 = vld [vmem:[%s1 + $0x20] sm:$0xf]
  %v28 = vld [vmem:[%s1 + $0x24] sm:$0xf]
  %v29 = vld [vmem:[%s1 + $0x28] sm:$0xf]
  %v30 = vld [vmem:[%s1 + $0x2c] sm:$0xf]
  %v31 = vld [vmem:[%s1 + $0x30] sm:$0xf]
  %v32 = vld [vmem:[%s1 + $0x34] sm:$0xf]
  %v33 = vld [vmem:[%s1 + $0x38] sm:$0xf]
  %v34 = vld [vmem:[%s1 + $0x3c] sm:$0xf]
  %v35 = vld [vmem:[%s1 + $0x40] sm:$0xf]
  %v36 = vld [vmem:[%s1 + $0x44] sm:$0xf]
  %v37 = vld [vmem:[%s1 + $0x48] sm:$0xf]
  %v38 = vld [vmem:[%s1 + $0x4c] sm:$0xf]
  %v39 = vld [vmem:[%s1 + $0x50] sm:$0xf]
  %v40 = vld [vmem:[%s1 + $0x54] sm:$0xf]
  %v41 = vld [vmem:[%s1 + $0x58] sm:$0xf]
  %v42 = vld [vmem:[%s1 + $0x5c] sm:$0xf]
  %v43 = vld [vmem:[%s1 + $0x60] sm:$0xf]
  %v44 = vld [vmem:[%s1 + $0x64] sm:$0xf]
  %v45 = vld [vmem:[%s1 + $0x68] sm:$0xf]
  %v46 = vld [vmem:[%s1 + $0x6c] sm:$0xf]
  %v47 = vld [vmem:[%s1 + $0x70] sm:$0xf]
  %v48 = vld [vmem:[%s1 + $0x74] sm:$0xf]
  %v49 = vld [vmem:[%s1 + $0x78] sm:$0xf]
  %v50 = vld [vmem:[%s1 + $0x7c] sm:$0xf]
  %v51 = vld [vmem:[%s2] sm:$0x1]
  %v53 = vlaneseq
  %v54 = vshrl.u32 %v53, 7
  %v55 = vsub.s32 0, %v54
  %v56 = vrot.slane %v51, %v55
  %v90 = vunpack.c.l.b16 %v19
  %v91 = vunpack.c.l.b16 %v20
  %v92 = vunpack.c.l.b16 %v21
  %v93 = vunpack.c.l.b16 %v22
  %v94 = vunpack.c.l.b16 %v23
  %v95 = vunpack.c.l.b16 %v24
  %v96 = vunpack.c.l.b16 %v25
  %v97 = vunpack.c.l.b16 %v26
  %v98 = vunpack.c.l.b16 %v27
  %v99 = vunpack.c.l.b16 %v28
  %v100 = vunpack.c.l.b16 %v29
  %v101 = vunpack.c.l.b16 %v30
  %v102 = vunpack.c.l.b16 %v31
  %v103 = vunpack.c.l.b16 %v32
  %v104 = vunpack.c.l.b16 %v33
  %v105 = vunpack.c.l.b16 %v34
  %v106 = vunpack.c.l.b16 %v35
  %v107 = vunpack.c.l.b16 %v36
  %v108 = vunpack.c.l.b16 %v37
  %v109 = vunpack.c.l.b16 %v38
  %v110 = vunpack.c.l.b16 %v39
  %v111 = vunpack.c.l.b16 %v40
  %v112 = vunpack.c.l.b16 %v41
  %v113 = vunpack.c.l.b16 %v42
  %v114 = vunpack.c.l.b16 %v43
  %v115 = vunpack.c.l.b16 %v44
  %v116 = vunpack.c.l.b16 %v45
  %v117 = vunpack.c.l.b16 %v46
  %v118 = vunpack.c.l.b16 %v47
  %v119 = vunpack.c.l.b16 %v48
  %v120 = vunpack.c.l.b16 %v49
  %v121 = vunpack.c.l.b16 %v50
  %v122 = vpack.c.b16 %v91, %v90
  %v123 = vpack.c.b16 %v93, %v92
  %v124 = vpack.c.b16 %v95, %v94
  %v125 = vpack.c.b16 %v97, %v96
  %v126 = vpack.c.b16 %v99, %v98
  %v127 = vpack.c.b16 %v101, %v100
  %v128 = vpack.c.b16 %v103, %v102
  %v129 = vpack.c.b16 %v105, %v104
  %v130 = vpack.c.b16 %v107, %v106
  %v131 = vpack.c.b16 %v109, %v108
  %v132 = vpack.c.b16 %v111, %v110
  %v133 = vpack.c.b16 %v113, %v112
  %v134 = vpack.c.b16 %v115, %v114
  %v135 = vpack.c.b16 %v117, %v116
  %v136 = vpack.c.b16 %v119, %v118
  %v137 = vpack.c.b16 %v121, %v120
  %154 = vmatprep.subr.bf16.mxu0 0
  %155 = vmatpush1.bf16.msra.mxu0 %v122
  %156 = vmatprep.subr.bf16.mxu0 0
  %157 = vmatpush1.bf16.msra.mxu0 %v123
  %158 = vmatprep.subr.bf16.mxu0 0
  %159 = vmatpush1.bf16.msra.mxu0 %v124
  %160 = vmatprep.subr.bf16.mxu0 0
  %161 = vmatpush1.bf16.msra.mxu0 %v125
  %162 = vmatprep.subr.bf16.mxu0 0
  %163 = vmatpush1.bf16.msra.mxu0 %v126
  %164 = vmatprep.subr.bf16.mxu0 0
  %165 = vmatpush1.bf16.msra.mxu0 %v127
  %166 = vmatprep.subr.bf16.mxu0 0
  %167 = vmatpush1.bf16.msra.mxu0 %v128
  %168 = vmatprep.subr.bf16.mxu0 0
  %169 = vmatpush1.bf16.msra.mxu0 %v129
  %170 = vmatprep.subr.bf16.mxu0 0
  %171 = vmatpush1.bf16.msra.mxu0 %v130
  %172 = vmatprep.subr.bf16.mxu0 0
  %173 = vmatpush1.bf16.msra.mxu0 %v131
  %174 = vmatprep.subr.bf16.mxu0 0
  %175 = vmatpush1.bf16.msra.mxu0 %v132
  %176 = vmatprep.subr.bf16.mxu0 0
  %177 = vmatpush1.bf16.msra.mxu0 %v133
  %178 = vmatprep.subr.bf16.mxu0 0
  %179 = vmatpush1.bf16.msra.mxu0 %v134
  %180 = vmatprep.subr.bf16.mxu0 0
  %181 = vmatpush1.bf16.msra.mxu0 %v135
  %182 = vmatprep.subr.bf16.mxu0 0
  %183 = vmatpush1.bf16.msra.mxu0 %v136
  %184 = vmatprep.subr.bf16.mxu0 0
  %185 = vmatpush1.bf16.msra.mxu0 %v137
  %186 = vmatprep.mubr.bf16.mxu0 %v18
  %187 = vmatmul.mubr.bf16.gmra.mrb[0].mxu0 %v17
  %v188 = vpop.f32.mrb[0].mxu0
  %v189 = vadd.f32 %v56, %v188
  %v190 = vpop.f32.mrb[0].mxu0
  %v191 = vpop.f32.mrb[0].mxu0
  %v192 = vpop.f32.mrb[0].mxu0
  %193 = vdwg.mxu0
  %vm194 = vcmask 261120
  %195 = vst.msk [vmem:[%s3] sm:$0xff] %vm194, %v189
  // Predicated region
  $region14: #{vit_forward.12} parent=0 // pred_check
    _
  $region15: #{vit_forward.12} parent=0 // pred_check_branch
    %197 = sbr.rel (0) target = $region17
  $region16: #{vit_forward.12} parent=0 // pred_region
    _
  $region17: #{vit_forward.12} parent=0 // pred_fallthru
    _
  // Predicated region
  $region18: #{vit_forward.12} parent=0 // pred_check
    _
  $region19: #{vit_forward.12} parent=0 // pred_check_branch
    %199 = sbr.rel (0) target = $region21
  $region20: #{vit_forward.12} parent=0 // pred_region
    _
  $region21: #{vit_forward.12} parent=0 // pred_fallthru
    _

// kernel: vit_forward.14
$region0: #{vit_forward.14}
  #allocation0 [shape = 'u32[]', space=smem, size = 0x4, offset = 0x4, fixed_abs, tag = 'smem constant byte address 0x4 - core index']
  #allocation1 [shape = 'u32[144,128]{1,0:T(1,128)}', space=vmem, size = 0x12000, scoped, tag = 'internal scratch']
  %s0 = inlined_call_operand.vmem [shape: bf16[2,5,96], index: 0, kind: input, shape index: {}]
  %s1 = inlined_call_operand.vmem [shape: bf16[2,5,32], index: 1, kind: output, shape index: {}]
  %s2 = sld [smem:[#allocation0]]
  $region37: #{vit_forward.14} parent=0
    _
  %s4 = ssub.s32 1, %s2
  %s5 = scalar_select 0, %s4, %s2
  loop: start=0, step=1, limit=4
  $region2: #{vit_forward.14} parent=0 // loop_pre_header
    _
  $region3: #{vit_forward.14} parent=0 // loop_header
    %s7 = sphi 0, %s11
    %p8 = scmp.ge.s32.totalorder %s7, 4
    %s17 = sphi 0, %s19
    %s20 = sphi 0, %s17
    %s21 = sphi 0, %s20
    %s37 = sphi 0, %s21
    %s43 = sphi 0, %s45
    %s46 = sphi 0, %s43
    %s47 = sphi 0, %s46
    %s63 = sphi 0, %s47
  $region4: #{vit_forward.14} parent=0 // loop_header_branch
    %10 = sbr.rel (%p8) target = $region8
  $region5: #{vit_forward.14} parent=0 // loop_body
    %s12 = ssub.s32 %s7, 1
    %s13 = ssub.s32 %s7, 2
    %s14 = sadd.s32 %s7, 1
    %s15 = ssub.s32 %s7, %s14
    %p16 = scmp.eq.s32.totalorder %s15, 0
    %s18 = sadd.s32 %s17, 1
    %s19 = scalar_select %p16, %s17, %s18
    %p22 = pneg %p16
    %p23 = scmp.eq.s32.totalorder %s7, 1
    %p24 = por %p22, %p23
    %p25 = scmp.ne.s32.totalorder %s17, %s20
    %p26 = scmp.eq.s32.totalorder %s7, 0
    %p27 = por %p25, %p26
    %p28 = scmp.ne.s32.totalorder %s17, %s20
    %p29 = scmp.eq.s32.totalorder %s12, 1
    %p30 = por %p28, %p29
    %p31 = scmp.ne.s32.totalorder %s20, %s21
    %p32 = scmp.eq.s32.totalorder %s12, 0
    %p33 = por %p31, %p32
    %p34 = scmp.ne.s32.totalorder %s20, %s21
    %p35 = scmp.eq.s32.totalorder %s13, 1
    %p36 = por %p34, %p35
    %p38 = scmp.ne.s32.totalorder %s21, %s37
    %p39 = scmp.eq.s32.totalorder %s13, 0
    %p40 = por %p38, %p39
    %s41 = ssub.s32 %s7, %s14
    %p42 = scmp.eq.s32.totalorder %s41, 0
    %s44 = sadd.s32 %s43, 1
    %s45 = scalar_select %p42, %s43, %s44
    %p48 = pneg %p42
    %p49 = scmp.eq.s32.totalorder %s7, 1
    %p50 = por %p48, %p49
    %p51 = scmp.ne.s32.totalorder %s43, %s46
    %p52 = scmp.eq.s32.totalorder %s7, 0
    %p53 = por %p51, %p52
    %p54 = scmp.ne.s32.totalorder %s43, %s46
    %p55 = scmp.eq.s32.totalorder %s12, 1
    %p56 = por %p54, %p55
    %p57 = scmp.ne.s32.totalorder %s46, %s47
    %p58 = scmp.eq.s32.totalorder %s12, 0
    %p59 = por %p57, %p58
    %p60 = scmp.ne.s32.totalorder %s46, %s47
    %p61 = scmp.eq.s32.totalorder %s13, 1
    %p62 = por %p60, %p61
    %p64 = scmp.ne.s32.totalorder %s47, %s63
    %p65 = scmp.eq.s32.totalorder %s13, 0
    %p66 = por %p64, %p65
    %p67 = scmp.le.s32.totalorder 1, %s7
    %p68 = scmp.lt.s32.totalorder %s7, 3
    %p69 = pnand %p67, %p68
    %p70 = pneg %p69
    // Predicated region
    $region9: #{vit_forward.14} parent=5 // pred_check
      _
    $region10: #{vit_forward.14} parent=5 // pred_check_branch
      %72 = sbr.rel (%p69) target = $region12
    $region11: #{vit_forward.14} parent=5 // pred_region
      %s73 = ssub.s32 %s7, 1
    $region12: #{vit_forward.14} parent=5 // pred_fallthru
      _
    %p74 = scmp.lt.s32.totalorder %s7, 2
    // Predicated region
    $region13: #{vit_forward.14} parent=5 // pred_check
      %p75 = pneg %p74
    $region14: #{vit_forward.14} parent=5 // pred_check_branch
      %77 = sbr.rel (%p75) target = $region16
    $region15: #{vit_forward.14} parent=5 // pred_region
      // Predicated region
      $region17: #{vit_forward.14} parent=15 // pred_check
        %p78 = pneg %p27
      $region18: #{vit_forward.14} parent=15 // pred_check_branch
        %80 = sbr.rel (%p78) target = $region20
      $region19: #{vit_forward.14} parent=15 // pred_region
        %p81 = scmp.lt.s32.totalorder %s7, 1
        %s82 = scalar_select %p81, %s7, 1
        %s83 = smul.addr %s82, 4
        %s84 = scalar_lea.vmem %s0, %s83
      $region20: #{vit_forward.14} parent=15 // pred_fallthru
        _
    $region16: #{vit_forward.14} parent=5 // pred_fallthru
      _
    %p85 = scmp.le.s32.totalorder 1, %s7
    %p86 = scmp.lt.s32.totalorder %s7, 3
    %p87 = pnand %p85, %p86
    %p88 = pneg %p87
    // Predicated region
    $region21: #{vit_forward.14} parent=5 // pred_check
      _
    $region22: #{vit_forward.14} parent=5 // pred_check_branch
      %90 = sbr.rel (%p87) target = $region24
    $region23: #{vit_forward.14} parent=5 // pred_region
      %s91 = ssub.s32 %s7, 1
      %p92 = scmp.lt.s32.totalorder %s12, 1
      %s93 = scalar_select %p92, %s12, 1
      %s94 = smul.addr %s93, 4
      %s95 = scalar_lea.vmem %s0, %s94
      %p96 = pneg %p33
      %p97 = pneg %p30
      %p98 = pneg %p59
      %p99 = pneg %p56
      %p100 = scmp.lt.s32.totalorder %s12, 1
      %s101 = scalar_select %p100, %s12, 1
      %s102 = smul.addr %s101, 4
      %s103 = scalar_lea.vmem %s1, %s102
      %p104 = scmp.lt.s32.totalorder %s12, 1
      %s105 = scalar_select %p104, %s12, 1
      %s106 = smul.addr %s105, 4
      %s107 = scalar_lea.vmem %s0, %s106
      %p108 = scmp.lt.s32.totalorder %s12, 1
      %s109 = scalar_select %p108, %s12, 1
      %s110 = smul.addr %s109, 4
      %s111 = scalar_lea.vmem %s1, %s110
      %v114 = vld [vmem:[%s107] sm:$0x7]
      %v115 = vmul.bf16 %v114, 1052065461
      %v117 = vunpack.c.l.b16 %v114
      %v118 = vpack.c.b16 %v117, %v117
      %119 = vrot.lane.b32.xlu0 %v118, 96
      %v120 = vpop.permute.xlu0 %119
      %vm121 = vcmask 64512
      %v123 = vsel %vm121, %v115, 0
      %v126 = vsel %vm121, %v120, 0
      %128 = vmatprep.subr.bf16.mxu0 0
      %129 = vmatpush1.bf16.xpose.msra.mxu0 %v126
      %130 = vmatprep.subr.bf16.mxu0 0
      %131 = vmatpush1.bf16.xpose.msra.mxu0 0
      %132 = vmatprep.subr.bf16.mxu0 0
      %133 = vmatpush1.bf16.xpose.msra.mxu0 0
      %134 = vmatprep.subr.bf16.mxu0 0
      %135 = vmatpush1.bf16.xpose.msra.mxu0 0
      %136 = vmatprep.subr.bf16.mxu0 0
      %137 = vmatpush1.bf16.xpose.msra.mxu0 0
      %138 = vmatprep.subr.bf16.mxu0 0
      %139 = vmatpush1.bf16.xpose.msra.mxu0 0
      %140 = vmatprep.subr.bf16.mxu0 0
      %141 = vmatpush1.bf16.xpose.msra.mxu0 0
      %142 = vmatprep.subr.bf16.mxu0 0
      %143 = vmatpush1.bf16.xpose.msra.mxu0 0
      %144 = vmatprep.subr.bf16.mxu0 0
      %145 = vmatpush1.bf16.xpose.msra.mxu0 0
      %146 = vmatprep.subr.bf16.mxu0 0
      %147 = vmatpush1.bf16.xpose.msra.mxu0 0
      %148 = vmatprep.subr.bf16.mxu0 0
      %149 = vmatpush1.bf16.xpose.msra.mxu0 0
      %150 = vmatprep.subr.bf16.mxu0 0
      %151 = vmatpush1.bf16.xpose.msra.mxu0 0
      %152 = vmatprep.subr.bf16.mxu0 0
      %153 = vmatpush1.bf16.xpose.msra.mxu0 0
      %154 = vmatprep.subr.bf16.mxu0 0
      %155 = vmatpush1.bf16.xpose.msra.mxu0 0
      %156 = vmatprep.subr.bf16.mxu0 0
      %157 = vmatpush1.bf16.xpose.msra.mxu0 0
      %158 = vmatprep.subr.bf16.mxu0 0
      %159 = vmatpush1.bf16.xpose.msra.mxu0 0
      %160 = vmatprep.mubr.bf16.mxu0 0
      %161 = vmatmul.mubr.bf16.gmra.mrb[0].mxu0 %v123
      %v162 = vpop.f32.mrb[0].mxu0
      %v163 = vadd.f32 0.0, %v162
      %v164 = vpop.f32.mrb[0].mxu0
      %v165 = vpop.f32.mrb[0].mxu0
      %v166 = vpop.f32.mrb[0].mxu0
      %167 = vdwg.mxu0
      %vm168 = vcmask 36864
      %v169 = vsel %vm168, %v163, -inf
      %170 = vmax.xlane.f32.xlu0 %v169
      %v171 = vpop.xlane.xlu0 %170
      %v172 = vsub.f32 %v163, %v171
      %v173 = vmul.f32 %v172, 1.442695
      %v174 = vpow.pop %v173
      %v175 = vsel %vm168, %v174, 0.0
      %176 = vadd.xlane.f32.xlu0 %v175
      %v177 = vpop.xlane.xlu0 %176
      %v178 = vrcp.pop %v177
      %v179 = vmul.f32 %v174, %v178
      %v180 = vpack.c.bf16 %v179, %v179
      %181 = vrot.lane.b32.xlu0 %v118, 64
      %v182 = vpop.permute.xlu0 %181
      %vm183 = vcmask 39936
      %v185 = vsel %vm183, %v180, 0
      %vm187 = vcmask 1041408
      %vm188 = vcmask 1042432
      %v189 = vsel %vm187, 4294967295, 65535
      %v190 = vsel %vm188, %v189, 0
      %v192 = vand.u32 %v182, %v190
      %194 = vmatprep.subr.bf16.mxu0 0
      %195 = vmatpush1.bf16.msra.mxu0 %v192
      %196 = vmatprep.subr.bf16.mxu0 0
      %197 = vmatpush1.bf16.msra.mxu0 0
      %198 = vmatprep.subr.bf16.mxu0 0
      %199 = vmatpush1.bf16.msra.mxu0 0
      %200 = vmatprep.subr.bf16.mxu0 0
      %201 = vmatpush1.bf16.msra.mxu0 0
      %202 = vmatprep.subr.bf16.mxu0 0
      %203 = vmatpush1.bf16.msra.mxu0 0
      %204 = vmatprep.subr.bf16.mxu0 0
      %205 = vmatpush1.bf16.msra.mxu0 0
      %206 = vmatprep.subr.bf16.mxu0 0
      %207 = vmatpush1.bf16.msra.mxu0 0
      %208 = vmatprep.subr.bf16.mxu0 0
      %209 = vmatpush1.bf16.msra.mxu0 0
      %210 = vmatprep.subr.bf16.mxu0 0
      %211 = vmatpush1.bf16.msra.mxu0 0
      %212 = vmatprep.subr.bf16.mxu0 0
      %213 = vmatpush1.bf16.msra.mxu0 0
      %214 = vmatprep.subr.bf16.mxu0 0
      %215 = vmatpush1.bf16.msra.mxu0 0
      %216 = vmatprep.subr.bf16.mxu0 0
      %217 = vmatpush1.bf16.msra.mxu0 0
      %218 = vmatprep.subr.bf16.mxu0 0
      %219 = vmatpush1.bf16.msra.mxu0 0
      %220 = vmatprep.subr.bf16.mxu0 0
      %221 = vmatpush1.bf16.msra.mxu0 0
      %222 = vmatprep.subr.bf16.mxu0 0
      %223 = vmatpush1.bf16.msra.mxu0 0
      %224 = vmatprep.subr.bf16.mxu0 0
      %225 = vmatpush1.bf16.msra.mxu0 0
      %226 = vmatprep.mubr.bf16.mxu0 0
      %227 = vmatmul.mubr.bf16.gmra.mrb[0].mxu0 %v185
      %v228 = vpop.f32.mrb[0].mxu0
      %v229 = vadd.f32 0.0, %v228
      %v230 = vpop.f32.mrb[0].mxu0
      %v231 = vpop.f32.mrb[0].mxu0
      %v232 = vpop.f32.mrb[0].mxu0
      %233 = vdwg.mxu0
      %v234 = vpack.c.bf16 %v229, %v229
      %vm235 = vcmask 59392
      %vm236 = vsmask.f32 2304
      %vm237 = vmand %vm235, %vm236
      %v238 = vld [vmem:[%s111] sm:$0x7]
      %v239 = vsel %vm237, %v234, %v238
      %240 = vst [vmem:[%s111] sm:$0x7] %v239
      %v241 = vld [vmem:[%s107] sm:$0x7]
      %v242 = vmul.bf16 %v241, 1052065461
      %v244 = vunpack.c.l.b16 %v242
      %v245 = vpack.c.b16 %v244, %v244
      %246 = vrot.lane.b32.xlu0 %v245, 120
      %v247 = vpop.permute.xlu0 %246
      %v249 = vunpack.c.l.b16 %v241
      %v250 = vpack.c.b16 %v249, %v249
      %251 = vrot.lane.b32.xlu0 %v250, 88
      %v252 = vpop.permute.xlu0 %251
      %v254 = vsel %vm121, %v247, 0
      %v257 = vsel %vm121, %v252, 0
      %259 = vmatprep.subr.bf16.mxu0 0
      %260 = vmatpush1.bf16.xpose.msra.mxu0 %v257
      %261 = vmatprep.subr.bf16.mxu0 0
      %262 = vmatpush1.bf16.xpose.msra.mxu0 0
      %263 = vmatprep.subr.bf16.mxu0 0
      %264 = vmatpush1.bf16.xpose.msra.mxu0 0
      %265 = vmatprep.subr.bf16.mxu0 0
      %266 = vmatpush1.bf16.xpose.msra.mxu0 0
      %267 = vmatprep.subr.bf16.mxu0 0
      %268 = vmatpush1.bf16.xpose.msra.mxu0 0
      %269 = vmatprep.subr.bf16.mxu0 0
      %270 = vmatpush1.bf16.xpose.msra.mxu0 0
      %271 = vmatprep.subr.bf16.mxu0 0
      %272 = vmatpush1.bf16.xpose.msra.mxu0 0
      %273 = vmatprep.subr.bf16.mxu0 0
      %274 = vmatpush1.bf16.xpose.msra.mxu0 0
      %275 = vmatprep.subr.bf16.mxu0 0
      %276 = vmatpush1.bf16.xpose.msra.mxu0 0
      %277 = vmatprep.subr.bf16.mxu0 0
      %278 = vmatpush1.bf16.xpose.msra.mxu0 0
      %279 = vmatprep.subr.bf16.mxu0 0
      %280 = vmatpush1.bf16.xpose.msra.mxu0 0
      %281 = vmatprep.subr.bf16.mxu0 0
      %282 = vmatpush1.bf16.xpose.msra.mxu0 0
      %283 = vmatprep.subr.bf16.mxu0 0
      %284 = vmatpush1.bf16.xpose.msra.mxu0 0
      %285 = vmatprep.subr.bf16.mxu0 0
      %286 = vmatpush1.bf16.xpose.msra.mxu0 0
      %287 = vmatprep.subr.bf16.mxu0 0
      %288 = vmatpush1.bf16.xpose.msra.mxu0 0
      %289 = vmatprep.subr.bf16.mxu0 0
      %290 = vmatpush1.bf16.xpose.msra.mxu0 0
      %291 = vmatprep.mubr.bf16.mxu0 0
      %292 = vmatmul.mubr.bf16.gmra.mrb[0].mxu0 %v254
      %v293 = vpop.f32.mrb[0].mxu0
      %v294 = vadd.f32 0.0, %v293
      %v295 = vpop.f32.mrb[0].mxu0
      %v296 = vpop.f32.mrb[0].mxu0
      %v297 = vpop.f32.mrb[0].mxu0
      %298 = vdwg.mxu0
      %v299 = vsel %vm168, %v294, -inf
      %300 = vmax.xlane.f32.xlu0 %v299
      %v301 = vpop.xlane.xlu0 %300
      %v302 = vsub.f32 %v294, %v301
      %v303 = vmul.f32 %v302, 1.442695
      %v304 = vpow.pop %v303
      %v305 = vsel %vm168, %v304, 0.0
      %306 = vadd.xlane.f32.xlu0 %v305
      %v307 = vpop.xlane.xlu0 %306
      %v308 = vrcp.pop %v307
      %v309 = vmul.f32 %v304, %v308
      %v310 = vpack.c.bf16 %v309, %v309
      %311 = vrot.lane.b32.xlu0 %v250, 56
      %v312 = vpop.permute.xlu0 %311
      %v314 = vsel %vm183, %v310, 0
      %v317 = vand.u32 %v312, %v190
      %319 = vmatprep.subr.bf16.mxu0 0
      %320 = vmatpush1.bf16.msra.mxu0 %v317
      %321 = vmatprep.subr.bf16.mxu0 0
      %322 = vmatpush1.bf16.msra.mxu0 0
      %323 = vmatprep.subr.bf16.mxu0 0
      %324 = vmatpush1.bf16.msra.mxu0 0
      %325 = vmatprep.subr.bf16.mxu0 0
      %326 = vmatpush1.bf16.msra.mxu0 0
      %327 = vmatprep.subr.bf16.mxu0 0
      %328 = vmatpush1.bf16.msra.mxu0 0
      %329 = vmatprep.subr.bf16.mxu0 0
      %330 = vmatpush1.bf16.msra.mxu0 0
      %331 = vmatprep.subr.bf16.mxu0 0
      %332 = vmatpush1.bf16.msra.mxu0 0
      %333 = vmatprep.subr.bf16.mxu0 0
      %334 = vmatpush1.bf16.msra.mxu0 0
      %335 = vmatprep.subr.bf16.mxu0 0
      %336 = vmatpush1.bf16.msra.mxu0 0
      %337 = vmatprep.subr.bf16.mxu0 0
      %338 = vmatpush1.bf16.msra.mxu0 0
      %339 = vmatprep.subr.bf16.mxu0 0
      %340 = vmatpush1.bf16.msra.mxu0 0
      %341 = vmatprep.subr.bf16.mxu0 0
      %342 = vmatpush1.bf16.msra.mxu0 0
      %343 = vmatprep.subr.bf16.mxu0 0
      %344 = vmatpush1.bf16.msra.mxu0 0
      %345 = vmatprep.subr.bf16.mxu0 0
      %346 = vmatpush1.bf16.msra.mxu0 0
      %347 = vmatprep.subr.bf16.mxu0 0
      %348 = vmatpush1.bf16.msra.mxu0 0
      %349 = vmatprep.subr.bf16.mxu0 0
      %350 = vmatpush1.bf16.msra.mxu0 0
      %351 = vmatprep.mubr.bf16.mxu0 0
      %352 = vmatmul.mubr.bf16.gmra.mrb[0].mxu0 %v314
      %v353 = vpop.f32.mrb[0].mxu0
      %v354 = vadd.f32 0.0, %v353
      %v355 = vpop.f32.mrb[0].mxu0
      %v356 = vpop.f32.mrb[0].mxu0
      %v357 = vpop.f32.mrb[0].mxu0
      %358 = vdwg.mxu0
      %v359 = vpack.c.bf16 %v354, %v354
      %v361 = vunpack.c.l.b16 %v359
      %v362 = vpack.c.b16 %v361, %v361
      %363 = vrot.lane.b32.xlu0 %v362, 8
      %v364 = vpop.permute.xlu0 %363
      %vm366 = vcmask 124992
      %vm367 = vmand %vm366, %vm236
      %v368 = vld [vmem:[%s111] sm:$0x7]
      %v369 = vsel %vm367, %v364, %v368
      %370 = vst [vmem:[%s111] sm:$0x7] %v369
      %v371 = vld [vmem:[%s107] sm:$0x7]
      %v372 = vmul.bf16 %v371, 1052065461
      %v374 = vunpack.c.l.b16 %v372
      %v375 = vpack.c.b16 %v374, %v374
      %376 = vrot.lane.b32.xlu0 %v375, 112
      %v377 = vpop.permute.xlu0 %376
      %v379 = vunpack.c.l.b16 %v371
      %v380 = vpack.c.b16 %v379, %v379
      %381 = vrot.lane.b32.xlu0 %v380, 80
      %v382 = vpop.permute.xlu0 %381
      %v384 = vsel %vm121, %v377, 0
      %v387 = vsel %vm121, %v382, 0
      %389 = vmatprep.subr.bf16.mxu0 0
      %390 = vmatpush1.bf16.xpose.msra.mxu0 %v387
      %391 = vmatprep.subr.bf16.mxu0 0
      %392 = vmatpush1.bf16.xpose.msra.mxu0 0
      %393 = vmatprep.subr.bf16.mxu0 0
      %394 = vmatpush1.bf16.xpose.msra.mxu0 0
      %395 = vmatprep.subr.bf16.mxu0 0
      %396 = vmatpush1.bf16.xpose.msra.mxu0 0
      %397 = vmatprep.subr.bf16.mxu0 0
      %398 = vmatpush1.bf16.xpose.msra.mxu0 0
      %399 = vmatprep.subr.bf16.mxu0 0
      %400 = vmatpush1.bf16.xpose.msra.mxu0 0
      %401 = vmatprep.subr.bf16.mxu0 0
      %402 = vmatpush1.bf16.xpose.msra.mxu0 0
      %403 = vmatprep.subr.bf16.mxu0 0
      %404 = vmatpush1.bf16.xpose.msra.mxu0 0
      %405 = vmatprep.subr.bf16.mxu0 0
      %406 = vmatpush1.bf16.xpose.msra.mxu0 0
      %407 = vmatprep.subr.bf16.mxu0 0
      %408 = vmatpush1.bf16.xpose.msra.mxu0 0
      %409 = vmatprep.subr.bf16.mxu0 0
      %410 = vmatpush1.bf16.xpose.msra.mxu0 0
      %411 = vmatprep.subr.bf16.mxu0 0
      %412 = vmatpush1.bf16.xpose.msra.mxu0 0
      %413 = vmatprep.subr.bf16.mxu0 0
      %414 = vmatpush1.bf16.xpose.msra.mxu0 0
      %415 = vmatprep.subr.bf16.mxu0 0
      %416 = vmatpush1.bf16.xpose.msra.mxu0 0
      %417 = vmatprep.subr.bf16.mxu0 0
      %418 = vmatpush1.bf16.xpose.msra.mxu0 0
      %419 = vmatprep.subr.bf16.mxu0 0
      %420 = vmatpush1.bf16.xpose.msra.mxu0 0
      %421 = vmatprep.mubr.bf16.mxu0 0
      %422 = vmatmul.mubr.bf16.gmra.mrb[0].mxu0 %v384
      %v423 = vpop.f32.mrb[0].mxu0
      %v424 = vadd.f32 0.0, %v423
      %v425 = vpop.f32.mrb[0].mxu0
      %v426 = vpop.f32.mrb[0].mxu0
      %v427 = vpop.f32.mrb[0].mxu0
      %428 = vdwg.mxu0
      %v429 = vsel %vm168, %v424, -inf
      %430 = vmax.xlane.f32.xlu0 %v429
      %v431 = vpop.xlane.xlu0 %430
      %v432 = vsub.f32 %v424, %v431
      %v433 = vmul.f32 %v432, 1.442695
      %v434 = vpow.pop %v433
      %v435 = vsel %vm168, %v434, 0.0
      %436 = vadd.xlane.f32.xlu0 %v435
      %v437 = vpop.xlane.xlu0 %436
      %v438 = vrcp.pop %v437
      %v439 = vmul.f32 %v434, %v438
      %v440 = vpack.c.bf16 %v439, %v439
      %441 = vrot.lane.b32.xlu0 %v380, 48
      %v442 = vpop.permute.xlu0 %441
      %v444 = vsel %vm183, %v440, 0
      %v447 = vand.u32 %v442, %v190
      %449 = vmatprep.subr.bf16.mxu0 0
      %450 = vmatpush1.bf16.msra.mxu0 %v447
      %451 = vmatprep.subr.bf16.mxu0 0
      %452 = vmatpush1.bf16.msra.mxu0 0
      %453 = vmatprep.subr.bf16.mxu0 0
      %454 = vmatpush1.bf16.msra.mxu0 0
      %455 = vmatprep.subr.bf16.mxu0 0
      %456 = vmatpush1.bf16.msra.mxu0 0
      %457 = vmatprep.subr.bf16.mxu0 0
      %458 = vmatpush1.bf16.msra.mxu0 0
      %459 = vmatprep.subr.bf16.mxu0 0
      %460 = vmatpush1.bf16.msra.mxu0 0
      %461 = vmatprep.subr.bf16.mxu0 0
      %462 = vmatpush1.bf16.msra.mxu0 0
      %463 = vmatprep.subr.bf16.mxu0 0
      %464 = vmatpush1.bf16.msra.mxu0 0
      %465 = vmatprep.subr.bf16.mxu0 0
      %466 = vmatpush1.bf16.msra.mxu0 0
      %467 = vmatprep.subr.bf16.mxu0 0
      %468 = vmatpush1.bf16.msra.mxu0 0
      %469 = vmatprep.subr.bf16.mxu0 0
      %470 = vmatpush1.bf16.msra.mxu0 0
      %471 = vmatprep.subr.bf16.mxu0 0
      %472 = vmatpush1.bf16.msra.mxu0 0
      %473 = vmatprep.subr.bf16.mxu0 0
      %474 = vmatpush1.bf16.msra.mxu0 0
      %475 = vmatprep.subr.bf16.mxu0 0
      %476 = vmatpush1.bf16.msra.mxu0 0
      %477 = vmatprep.subr.bf16.mxu0 0
      %478 = vmatpush1.bf16.msra.mxu0 0
      %479 = vmatprep.subr.bf16.mxu0 0
      %480 = vmatpush1.bf16.msra.mxu0 0
      %481 = vmatprep.mubr.bf16.mxu0 0
      %482 = vmatmul.mubr.bf16.gmra.mrb[0].mxu0 %v444
      %v483 = vpop.f32.mrb[0].mxu0
      %v484 = vadd.f32 0.0, %v483
      %v485 = vpop.f32.mrb[0].mxu0
      %v486 = vpop.f32.mrb[0].mxu0
      %v487 = vpop.f32.mrb[0].mxu0
      %488 = vdwg.mxu0
      %v489 = vpack.c.bf16 %v484, %v484
      %v491 = vunpack.c.l.b16 %v489
      %v492 = vpack.c.b16 %v491, %v491
      %493 = vrot.lane.b32.xlu0 %v492, 16
      %v494 = vpop.permute.xlu0 %493
      %vm496 = vcmask 190592
      %vm497 = vmand %vm496, %vm236
      %v498 = vld [vmem:[%s111] sm:$0x7]
      %v499 = vsel %vm497, %v494, %v498
      %500 = vst [vmem:[%s111] sm:$0x7] %v499
      %v501 = vld [vmem:[%s107] sm:$0x7]
      %v502 = vmul.bf16 %v501, 1052065461
      %v504 = vunpack.c.l.b16 %v502
      %v505 = vpack.c.b16 %v504, %v504
      %506 = vrot.lane.b32.xlu0 %v505, 104
      %v507 = vpop.permute.xlu0 %506
      %v509 = vunpack.c.l.b16 %v501
      %v510 = vpack.c.b16 %v509, %v509
      %511 = vrot.lane.b32.xlu0 %v510, 72
      %v512 = vpop.permute.xlu0 %511
      %v514 = vsel %vm121, %v507, 0
      %v517 = vsel %vm121, %v512, 0
      %519 = vmatprep.subr.bf16.mxu0 0
      %520 = vmatpush1.bf16.xpose.msra.mxu0 %v517
      %521 = vmatprep.subr.bf16.mxu0 0
      %522 = vmatpush1.bf16.xpose.msra.mxu0 0
      %523 = vmatprep.subr.bf16.mxu0 0
      %524 = vmatpush1.bf16.xpose.msra.mxu0 0
      %525 = vmatprep.subr.bf16.mxu0 0
      %526 = vmatpush1.bf16.xpose.msra.mxu0 0
      %527 = vmatprep.subr.bf16.mxu0 0
      %528 = vmatpush1.bf16.xpose.msra.mxu0 0
      %529 = vmatprep.subr.bf16.mxu0 0
      %530 = vmatpush1.bf16.xpose.msra.mxu0 0
      %531 = vmatprep.subr.bf16.mxu0 0
      %532 = vmatpush1.bf16.xpose.msra.mxu0 0
      %533 = vmatprep.subr.bf16.mxu0 0
      %534 = vmatpush1.bf16.xpose.msra.mxu0 0
      %535 = vmatprep.subr.bf16.mxu0 0
      %536 = vmatpush1.bf16.xpose.msra.mxu0 0
      %537 = vmatprep.subr.bf16.mxu0 0
      %538 = vmatpush1.bf16.xpose.msra.mxu0 0
      %539 = vmatprep.subr.bf16.mxu0 0
      %540 = vmatpush1.bf16.xpose.msra.mxu0 0
      %541 = vmatprep.subr.bf16.mxu0 0
      %542 = vmatpush1.bf16.xpose.msra.mxu0 0
      %543 = vmatprep.subr.bf16.mxu0 0
      %544 = vmatpush1.bf16.xpose.msra.mxu0 0
      %545 = vmatprep.subr.bf16.mxu0 0
      %546 = vmatpush1.bf16.xpose.msra.mxu0 0
      %547 = vmatprep.subr.bf16.mxu0 0
      %548 = vmatpush1.bf16.xpose.msra.mxu0 0
      %549 = vmatprep.subr.bf16.mxu0 0
      %550 = vmatpush1.bf16.xpose.msra.mxu0 0
      %551 = vmatprep.mubr.bf16.mxu0 0
      %552 = vmatmul.mubr.bf16.gmra.mrb[0].mxu0 %v514
      %v553 = vpop.f32.mrb[0].mxu0
      %v554 = vadd.f32 0.0, %v553
      %v555 = vpop.f32.mrb[0].mxu0
      %v556 = vpop.f32.mrb[0].mxu0
      %v557 = vpop.f32.mrb[0].mxu0
      %558 = vdwg.mxu0
      %v559 = vsel %vm168, %v554, -inf
      %560 = vmax.xlane.f32.xlu0 %v559
      %v561 = vpop.xlane.xlu0 %560
      %v562 = vsub.f32 %v554, %v561
      %v563 = vmul.f32 %v562, 1.442695
      %v564 = vpow.pop %v563
      %v565 = vsel %vm168, %v564, 0.0
      %566 = vadd.xlane.f32.xlu0 %v565
      %v567 = vpop.xlane.xlu0 %566
      %v568 = vrcp.pop %v567
      %v569 = vmul.f32 %v564, %v568
      %v570 = vpack.c.bf16 %v569, %v569
      %571 = vrot.lane.b32.xlu0 %v510, 40
      %v572 = vpop.permute.xlu0 %571
      %v574 = vsel %vm183, %v570, 0
      %v577 = vand.u32 %v572, %v190
      %579 = vmatprep.subr.bf16.mxu0 0
      %580 = vmatpush1.bf16.msra.mxu0 %v577
      %581 = vmatprep.subr.bf16.mxu0 0
      %582 = vmatpush1.bf16.msra.mxu0 0
      %583 = vmatprep.subr.bf16.mxu0 0
      %584 = vmatpush1.bf16.msra.mxu0 0
      %585 = vmatprep.subr.bf16.mxu0 0
      %586 = vmatpush1.bf16.msra.mxu0 0
      %587 = vmatprep.subr.bf16.mxu0 0
      %588 = vmatpush1.bf16.msra.mxu0 0
      %589 = vmatprep.subr.bf16.mxu0 0
      %590 = vmatpush1.bf16.msra.mxu0 0
      %591 = vmatprep.subr.bf16.mxu0 0
      %592 = vmatpush1.bf16.msra.mxu0 0
      %593 = vmatprep.subr.bf16.mxu0 0
      %594 = vmatpush1.bf16.msra.mxu0 0
      %595 = vmatprep.subr.bf16.mxu0 0
      %596 = vmatpush1.bf16.msra.mxu0 0
      %597 = vmatprep.subr.bf16.mxu0 0
      %598 = vmatpush1.bf16.msra.mxu0 0
      %599 = vmatprep.subr.bf16.mxu0 0
      %600 = vmatpush1.bf16.msra.mxu0 0
      %601 = vmatprep.subr.bf16.mxu0 0
      %602 = vmatpush1.bf16.msra.mxu0 0
      %603 = vmatprep.subr.bf16.mxu0 0
      %604 = vmatpush1.bf16.msra.mxu0 0
      %605 = vmatprep.subr.bf16.mxu0 0
      %606 = vmatpush1.bf16.msra.mxu0 0
      %607 = vmatprep.subr.bf16.mxu0 0
      %608 = vmatpush1.bf16.msra.mxu0 0
      %609 = vmatprep.subr.bf16.mxu0 0
      %610 = vmatpush1.bf16.msra.mxu0 0
      %611 = vmatprep.mubr.bf16.mxu0 0
      %612 = vmatmul.mubr.bf16.gmra.mrb[0].mxu0 %v574
      %v613 = vpop.f32.mrb[0].mxu0
      %v614 = vadd.f32 0.0, %v613
      %v615 = vpop.f32.mrb[0].mxu0
      %v616 = vpop.f32.mrb[0].mxu0
      %v617 = vpop.f32.mrb[0].mxu0
      %618 = vdwg.mxu0
      %v619 = vpack.c.bf16 %v614, %v614
      %v621 = vunpack.c.l.b16 %v619
      %v622 = vpack.c.b16 %v621, %v621
      %623 = vrot.lane.b32.xlu0 %v622, 24
      %v624 = vpop.permute.xlu0 %623
      %vm626 = vcmask 256192
      %vm627 = vmand %vm626, %vm236
      %v628 = vld [vmem:[%s111] sm:$0x7]
      %v629 = vsel %vm627, %v624, %v628
      %630 = vst [vmem:[%s111] sm:$0x7] %v629
      %p631 = scmp.lt.s32.totalorder %s12, 1
      %s632 = scalar_select %p631, %s12, 1
      %s633 = smul.addr %s632, 4
      %s634 = scalar_lea.vmem %s1, %s633
      // Predicated region
      $region25: #{vit_forward.14} parent=23 // pred_check
        %p635 = pneg %p56
      $region26: #{vit_forward.14} parent=23 // pred_check_branch
        %637 = sbr.rel (%p635) target = $region28
      $region27: #{vit_forward.14} parent=23 // pred_region
        _
      $region28: #{vit_forward.14} parent=23 // pred_fallthru
        _
    $region24: #{vit_forward.14} parent=5 // pred_fallthru
      _
    %p638 = scmp.le.s32.totalorder 2, %s7
    // Predicated region
    $region29: #{vit_forward.14} parent=5 // pred_check
      %p639 = pneg %p638
    $region30: #{vit_forward.14} parent=5 // pred_check_branch
      %641 = sbr.rel (%p639) target = $region32
    $region31: #{vit_forward.14} parent=5 // pred_region
      %s642 = ssub.s32 %s7, 2
      // Predicated region
      $region33: #{vit_forward.14} parent=31 // pred_check
        %p643 = pneg %p62
      $region34: #{vit_forward.14} parent=31 // pred_check_branch
        %645 = sbr.rel (%p643) target = $region36
      $region35: #{vit_forward.14} parent=31 // pred_region
        %p646 = scmp.lt.s32.totalorder %s13, 1
        %s647 = scalar_select %p646, %s13, 1
        %s648 = smul.addr %s647, 4
        %s649 = scalar_lea.vmem %s1, %s648
      $region36: #{vit_forward.14} parent=31 // pred_fallthru
        _
    $region32: #{vit_forward.14} parent=5 // pred_fallthru
      _
  $region6: #{vit_forward.14} parent=0 // loop_footer
    %s11 = sadd.s32 1, %s7
  $region7: #{vit_forward.14} parent=0 // loop_footer_branch
    %6 = sbr.rel target = $region3
  $region8: #{vit_forward.14} parent=0 // loop_exit
    _

// kernel: vit_forward.17
$region0: #{vit_forward.17}
  #allocation0 [shape = 'u32[]', space=smem, size = 0x4, offset = 0x4, fixed_abs, tag = 'smem constant byte address 0x4 - core index']
  #allocation1 [shape = 'u32[144,128]{1,0:T(1,128)}', space=vmem, size = 0x12000, scoped, tag = 'internal scratch']
  %s0 = inlined_call_operand.vmem [shape: bf16[10,64], index: 0, kind: input, shape index: {}]
  %s1 = inlined_call_operand.vmem [shape: bf16[64,32], index: 1, kind: input, shape index: {}]
  %s2 = inlined_call_operand.vmem [shape: f32[1,32], index: 2, kind: input, shape index: {}]
  %s3 = inlined_call_operand.vmem [shape: f32[10,32], index: 3, kind: input, shape index: {}]
  %s4 = inlined_call_operand.vmem [shape: f32[10,32], index: 4, kind: output, shape index: {}]
  %s5 = sld [smem:[#allocation0]]
  $region26: #{vit_forward.17} parent=0
    _
  %s7 = ssub.s32 1, %s5
  %s8 = scalar_select 0, %s7, %s5
  // Predicated region
  $region2: #{vit_forward.17} parent=0 // pred_check
    _
  $region3: #{vit_forward.17} parent=0 // pred_check_branch
    %10 = sbr.rel (0) target = $region5
  $region4: #{vit_forward.17} parent=0 // pred_region
    _
  $region5: #{vit_forward.17} parent=0 // pred_fallthru
    _
  // Predicated region
  $region6: #{vit_forward.17} parent=0 // pred_check
    _
  $region7: #{vit_forward.17} parent=0 // pred_check_branch
    %12 = sbr.rel (0) target = $region9
  $region8: #{vit_forward.17} parent=0 // pred_region
    _
  $region9: #{vit_forward.17} parent=0 // pred_fallthru
    _
  // Predicated region
  $region10: #{vit_forward.17} parent=0 // pred_check
    _
  $region11: #{vit_forward.17} parent=0 // pred_check_branch
    %14 = sbr.rel (0) target = $region13
  $region12: #{vit_forward.17} parent=0 // pred_region
    _
  $region13: #{vit_forward.17} parent=0 // pred_fallthru
    _
  // Predicated region
  $region14: #{vit_forward.17} parent=0 // pred_check
    _
  $region15: #{vit_forward.17} parent=0 // pred_check_branch
    %16 = sbr.rel (0) target = $region17
  $region16: #{vit_forward.17} parent=0 // pred_region
    _
  $region17: #{vit_forward.17} parent=0 // pred_fallthru
    _
  %v18 = vld [vmem:[%s0] sm:$0xf]
  %v19 = vld [vmem:[%s0 + $0x4] sm:$0x1]
  %v20 = vld [vmem:[%s1] sm:$0xf]
  %v21 = vld [vmem:[%s1 + $0x4] sm:$0xf]
  %v22 = vld [vmem:[%s1 + $0x8] sm:$0xf]
  %v23 = vld [vmem:[%s1 + $0xc] sm:$0xf]
  %v24 = vld [vmem:[%s1 + $0x10] sm:$0xf]
  %v25 = vld [vmem:[%s1 + $0x14] sm:$0xf]
  %v26 = vld [vmem:[%s1 + $0x18] sm:$0xf]
  %v27 = vld [vmem:[%s1 + $0x1c] sm:$0xf]
  %v30 = vunpack.c.l.b16 %v18
  %v31 = vunpack.c.l.b16 %v19
  %v32 = vpack.c.b16 %v31, %v30
  %v41 = vunpack.c.l.b16 %v20
  %v42 = vunpack.c.l.b16 %v21
  %v43 = vunpack.c.l.b16 %v22
  %v44 = vunpack.c.l.b16 %v23
  %v45 = vunpack.c.l.b16 %v24
  %v46 = vunpack.c.l.b16 %v25
  %v47 = vunpack.c.l.b16 %v26
  %v48 = vunpack.c.l.b16 %v27
  %v49 = vpack.c.b16 %v42, %v41
  %v50 = vpack.c.b16 %v44, %v43
  %v51 = vpack.c.b16 %v46, %v45
  %v52 = vpack.c.b16 %v48, %v47
  %vm57 = vcmask 523264
  %v59 = vsel %vm57, %v32, 0
  %61 = vmatprep.subr.bf16.mxu0 0
  %62 = vmatpush1.bf16.msra.mxu0 %v49
  %63 = vmatprep.subr.bf16.mxu0 0
  %64 = vmatpush1.bf16.msra.mxu0 %v50
  %65 = vmatprep.subr.bf16.mxu0 0
  %66 = vmatpush1.bf16.msra.mxu0 %v51
  %67 = vmatprep.subr.bf16.mxu0 0
  %68 = vmatpush1.bf16.msra.mxu0 %v52
  %69 = vmatprep.subr.bf16.mxu0 0
  %70 = vmatpush1.bf16.msra.mxu0 0
  %71 = vmatprep.subr.bf16.mxu0 0
  %72 = vmatpush1.bf16.msra.mxu0 0
  %73 = vmatprep.subr.bf16.mxu0 0
  %74 = vmatpush1.bf16.msra.mxu0 0
  %75 = vmatprep.subr.bf16.mxu0 0
  %76 = vmatpush1.bf16.msra.mxu0 0
  %77 = vmatprep.subr.bf16.mxu0 0
  %78 = vmatpush1.bf16.msra.mxu0 0
  %79 = vmatprep.subr.bf16.mxu0 0
  %80 = vmatpush1.bf16.msra.mxu0 0
  %81 = vmatprep.subr.bf16.mxu0 0
  %82 = vmatpush1.bf16.msra.mxu0 0
  %83 = vmatprep.subr.bf16.mxu0 0
  %84 = vmatpush1.bf16.msra.mxu0 0
  %85 = vmatprep.subr.bf16.mxu0 0
  %86 = vmatpush1.bf16.msra.mxu0 0
  %87 = vmatprep.subr.bf16.mxu0 0
  %88 = vmatpush1.bf16.msra.mxu0 0
  %89 = vmatprep.subr.bf16.mxu0 0
  %90 = vmatpush1.bf16.msra.mxu0 0
  %91 = vmatprep.subr.bf16.mxu0 0
  %92 = vmatpush1.bf16.msra.mxu0 0
  %93 = vmatprep.mubr.bf16.mxu0 0
  %94 = vmatmul.mubr.bf16.gmra.mrb[0].mxu0 %v59
  %v95 = vpop.f32.mrb[0].mxu0
  %v96 = vadd.f32 0.0, %v95
  %v97 = vpop.f32.mrb[0].mxu0
  %v98 = vpop.f32.mrb[0].mxu0
  %v99 = vadd.f32 0.0, %v98
  %v100 = vpop.f32.mrb[0].mxu0
  %101 = vdwg.mxu0
  %v102 = vld [vmem:[%s3] sm:$0xff]
  %v103 = vld [vmem:[%s3 + $0x8] sm:$0x3]
  %v104 = vadd.f32 %v102, %v96
  %v105 = vadd.f32 %v103, %v99
  %v106 = vld [vmem:[%s2] sm:$0x1]
  %v108 = vlaneseq
  %v109 = vshrl.u32 %v108, 7
  %v110 = vsub.s32 0, %v109
  %v111 = vrot.slane %v106, %v110
  %v113 = vadd.f32 %v104, %v111
  %v114 = vadd.f32 %v105, %v111
  %vm115 = vcmask 261120
  %116 = vst.msk [vmem:[%s4] sm:$0xff] %vm115, %v113
  %vm117 = vcmask 254976
  %118 = vst.msk [vmem:[%s4 + $0x8] sm:$0x3] %vm117, %v114
  // Predicated region
  $region18: #{vit_forward.17} parent=0 // pred_check
    _
  $region19: #{vit_forward.17} parent=0 // pred_check_branch
    %120 = sbr.rel (0) target = $region21
  $region20: #{vit_forward.17} parent=0 // pred_region
    _
  $region21: #{vit_forward.17} parent=0 // pred_fallthru
    _
  // Predicated region
  $region22: #{vit_forward.17} parent=0 // pred_check
    _
  $region23: #{vit_forward.17} parent=0 // pred_check_branch
    %122 = sbr.rel (0) target = $region25
  $region24: #{vit_forward.17} parent=0 // pred_region
    _
  $region25: #{vit_forward.17} parent=0 // pred_fallthru
    _

// kernel: vit_forward.16
$region0: #{vit_forward.16}
  #allocation0 [shape = 'u32[]', space=smem, size = 0x4, offset = 0x4, fixed_abs, tag = 'smem constant byte address 0x4 - core index']
  #allocation1 [shape = 'u32[144,128]{1,0:T(1,128)}', space=vmem, size = 0x12000, scoped, tag = 'internal scratch']
  #allocation2 [shape = 'bf16[10,32]{1,0:T(8,128)(2,1)}', space=vmem, size = 0x1000, scoped, tag = 'scratch operand']
  %s0 = inlined_call_operand.vmem [shape: f32[10,32], index: 0, kind: input, shape index: {}]
  %s1 = inlined_call_operand.vmem [shape: f32[1,32], index: 1, kind: input, shape index: {}]
  %s2 = inlined_call_operand.vmem [shape: f32[1,32], index: 2, kind: input, shape index: {}]
  %s3 = inlined_call_operand.vmem [shape: bf16[32,64], index: 3, kind: input, shape index: {}]
  %s4 = inlined_call_operand.vmem [shape: f32[1,64], index: 4, kind: input, shape index: {}]
  %s5 = inlined_call_operand.vmem [shape: bf16[10,64], index: 5, kind: output, shape index: {}]
  %s6 = sld [smem:[#allocation0]]
  $region34: #{vit_forward.16} parent=0
    _
  %s8 = ssub.s32 1, %s6
  %s9 = scalar_select 0, %s8, %s6
  // Predicated region
  $region2: #{vit_forward.16} parent=0 // pred_check
    _
  $region3: #{vit_forward.16} parent=0 // pred_check_branch
    %11 = sbr.rel (0) target = $region5
  $region4: #{vit_forward.16} parent=0 // pred_region
    _
  $region5: #{vit_forward.16} parent=0 // pred_fallthru
    _
  // Predicated region
  $region6: #{vit_forward.16} parent=0 // pred_check
    _
  $region7: #{vit_forward.16} parent=0 // pred_check_branch
    %13 = sbr.rel (0) target = $region9
  $region8: #{vit_forward.16} parent=0 // pred_region
    _
  $region9: #{vit_forward.16} parent=0 // pred_fallthru
    _
  // Predicated region
  $region10: #{vit_forward.16} parent=0 // pred_check
    _
  $region11: #{vit_forward.16} parent=0 // pred_check_branch
    %15 = sbr.rel (0) target = $region13
  $region12: #{vit_forward.16} parent=0 // pred_region
    _
  $region13: #{vit_forward.16} parent=0 // pred_fallthru
    _
  // Predicated region
  $region14: #{vit_forward.16} parent=0 // pred_check
    _
  $region15: #{vit_forward.16} parent=0 // pred_check_branch
    %17 = sbr.rel (0) target = $region17
  $region16: #{vit_forward.16} parent=0 // pred_region
    _
  $region17: #{vit_forward.16} parent=0 // pred_fallthru
    _
  // Predicated region
  $region18: #{vit_forward.16} parent=0 // pred_check
    _
  $region19: #{vit_forward.16} parent=0 // pred_check_branch
    %19 = sbr.rel (0) target = $region21
  $region20: #{vit_forward.16} parent=0 // pred_region
    _
  $region21: #{vit_forward.16} parent=0 // pred_fallthru
    _
  %p21 = scmp.eq.s32.totalorder 0, 0
  // Predicated region
  $region22: #{vit_forward.16} parent=0 // pred_check
    %p22 = pneg %p21
  $region23: #{vit_forward.16} parent=0 // pred_check_branch
    %24 = sbr.rel (%p22) target = $region25
  $region24: #{vit_forward.16} parent=0 // pred_region
    %v25 = vld [vmem:[%s0] sm:$0xff]
    %v26 = vld [vmem:[%s0 + $0x8] sm:$0x3]
    %vm27 = vcmask 261120
    %v28 = vsel %vm27, %v25, 0.0
    %29 = vadd.xlane.f32.xlu0 %v28
    %v30 = vpop.xlane.xlu0 %29
    %vm31 = vcmask 254976
    %v32 = vsel %vm31, %v26, 0.0
    %33 = vadd.xlane.f32.xlu0 %v32
    %v34 = vpop.xlane.xlu0 %33
    %v35 = vrcp.pop 32.0
    %v36 = vmul.f32 %v30, %v35
    %v37 = vmul.f32 %v34, %v35
    %v38 = vsub.f32 %v25, %v36
    %v39 = vsub.f32 %v26, %v37
    %v40 = vmul.f32 %v38, %v38
    %v41 = vmul.f32 %v39, %v39
    %v42 = vsel %vm27, %v40, 0.0
    %43 = vadd.xlane.f32.xlu0 %v42
    %v44 = vpop.xlane.xlu0 %43
    %v45 = vsel %vm31, %v41, 0.0
    %46 = vadd.xlane.f32.xlu0 %v45
    %v47 = vpop.xlane.xlu0 %46
    %v48 = vmul.f32 %v44, %v35
    %v49 = vmul.f32 %v47, %v35
    %v50 = vadd.f32 %v48, 1e-05
    %v51 = vadd.f32 %v49, 1e-05
    %v52 = vrsqrt.pop %v50
    %v53 = vrsqrt.pop %v51
    %v54 = vmul.f32 %v38, %v52
    %v55 = vmul.f32 %v39, %v53
    %v56 = vld [vmem:[%s1] sm:$0x1]
    %v58 = vlaneseq
    %v59 = vshrl.u32 %v58, 7
    %v60 = vsub.s32 0, %v59
    %v61 = vrot.slane %v56, %v60
    %v63 = vmul.f32 %v54, %v61
    %v64 = vmul.f32 %v55, %v61
    %v65 = vld [vmem:[%s2] sm:$0x1]
    %v67 = vlaneseq
    %v68 = vshrl.u32 %v67, 7
    %v69 = vsub.s32 0, %v68
    %v70 = vrot.slane %v65, %v69
    %v72 = vadd.f32 %v63, %v70
    %v73 = vadd.f32 %v64, %v70
    %v74 = vpack.c.bf16 %v73, %v72
    %v76 = vunpack.c.l.b16 %v74
    %v77 = vunpack.c.h.b16 %v74
    %v78 = vpack.c.b16 %v76, %v76
    %v79 = vpack.c.b16 %v77, %v77
    %vm82 = vcmask 257024
    %83 = vst.msk [vmem:[#allocation2] sm:$0xf] %vm82, %v78
    %vm84 = vcmask 253952
    %85 = vst.msk [vmem:[#allocation2 + $0x4] sm:$0x1] %vm84, %v79
  $region25: #{vit_forward.16} parent=0 // pred_fallthru
    _
  %v86 = vld [vmem:[#allocation2] sm:$0xf]
  %v87 = vld [vmem:[#allocation2 + $0x4] sm:$0x1]
  %v88 = vld [vmem:[%s3] sm:$0xf]
  %v89 = vld [vmem:[%s3 + $0x4] sm:$0xf]
  %v90 = vld [vmem:[%s3 + $0x8] sm:$0xf]
  %v91 = vld [vmem:[%s3 + $0xc] sm:$0xf]
  %v92 = vld [vmem:[%s4] sm:$0x1]
  %v94 = vlaneseq
  %v95 = vshrl.u32 %v94, 7
  %v96 = vsub.s32 0, %v95
  %v97 = vrot.slane %v92, %v96
  %v101 = vunpack.c.l.b16 %v86
  %v102 = vunpack.c.l.b16 %v87
  %v103 = vpack.c.b16 %v102, %v101
  %v108 = vunpack.c.l.b16 %v88
  %v109 = vunpack.c.l.b16 %v89
  %v110 = vunpack.c.l.b16 %v90
  %v111 = vunpack.c.l.b16 %v91
  %v112 = vpack.c.b16 %v109, %v108
  %v113 = vpack.c.b16 %v111, %v110
  %vm116 = vcmask 261120
  %v118 = vsel %vm116, %v103, 0
  %120 = vmatprep.subr.bf16.mxu0 0
  %121 = vmatpush1.bf16.msra.mxu0 %v112
  %122 = vmatprep.subr.bf16.mxu0 0
  %123 = vmatpush1.bf16.msra.mxu0 %v113
  %124 = vmatprep.subr.bf16.mxu0 0
  %125 = vmatpush1.bf16.msra.mxu0 0
  %126 = vmatprep.subr.bf16.mxu0 0
  %127 = vmatpush1.bf16.msra.mxu0 0
  %128 = vmatprep.subr.bf16.mxu0 0
  %129 = vmatpush1.bf16.msra.mxu0 0
  %130 = vmatprep.subr.bf16.mxu0 0
  %131 = vmatpush1.bf16.msra.mxu0 0
  %132 = vmatprep.subr.bf16.mxu0 0
  %133 = vmatpush1.bf16.msra.mxu0 0
  %134 = vmatprep.subr.bf16.mxu0 0
  %135 = vmatpush1.bf16.msra.mxu0 0
  %136 = vmatprep.subr.bf16.mxu0 0
  %137 = vmatpush1.bf16.msra.mxu0 0
  %138 = vmatprep.subr.bf16.mxu0 0
  %139 = vmatpush1.bf16.msra.mxu0 0
  %140 = vmatprep.subr.bf16.mxu0 0
  %141 = vmatpush1.bf16.msra.mxu0 0
  %142 = vmatprep.subr.bf16.mxu0 0
  %143 = vmatpush1.bf16.msra.mxu0 0
  %144 = vmatprep.subr.bf16.mxu0 0
  %145 = vmatpush1.bf16.msra.mxu0 0
  %146 = vmatprep.subr.bf16.mxu0 0
  %147 = vmatpush1.bf16.msra.mxu0 0
  %148 = vmatprep.subr.bf16.mxu0 0
  %149 = vmatpush1.bf16.msra.mxu0 0
  %150 = vmatprep.subr.bf16.mxu0 0
  %151 = vmatpush1.bf16.msra.mxu0 0
  %152 = vmatprep.mubr.bf16.mxu0 0
  %153 = vmatmul.mubr.bf16.gmra.mrb[0].mxu0 %v118
  %v154 = vpop.f32.mrb[0].mxu0
  %v155 = vadd.f32 %v97, %v154
  %v156 = vpop.f32.mrb[0].mxu0
  %v157 = vpop.f32.mrb[0].mxu0
  %v158 = vadd.f32 %v97, %v157
  %v159 = vpop.f32.mrb[0].mxu0
  %160 = vdwg.mxu0
  %v161 = vmul.f32 %v155, 0.5
  %v162 = vmul.f32 %v158, 0.5
  %v163 = vmul.f32 %v155, 0.70710677
  %v164 = vmul.f32 %v158, 0.70710677
  %v165 = verf.f32.pop %v163
  %v166 = verf.f32.pop %v164
  %v167 = vadd.f32 %v165, 1.0
  %v168 = vadd.f32 %v166, 1.0
  %v169 = vmul.f32 %v161, %v167
  %v170 = vmul.f32 %v162, %v168
  %v171 = vpack.c.bf16 %v170, %v169
  %v173 = vunpack.c.l.b16 %v171
  %v174 = vunpack.c.h.b16 %v171
  %v175 = vpack.c.b16 %v173, %v173
  %v176 = vpack.c.b16 %v174, %v174
  %vm179 = vcmask 519168
  %180 = vst.msk [vmem:[%s5] sm:$0xf] %vm179, %v175
  %vm181 = vcmask 516096
  %182 = vst.msk [vmem:[%s5 + $0x4] sm:$0x1] %vm181, %v176
  // Predicated region
  $region26: #{vit_forward.16} parent=0 // pred_check
    _
  $region27: #{vit_forward.16} parent=0 // pred_check_branch
    %184 = sbr.rel (0) target = $region29
  $region28: #{vit_forward.16} parent=0 // pred_region
    _
  $region29: #{vit_forward.16} parent=0 // pred_fallthru
    _
  // Predicated region
  $region30: #{vit_forward.16} parent=0 // pred_check
    _
  $region31: #{vit_forward.16} parent=0 // pred_check_branch
    %186 = sbr.rel (0) target = $region33
  $region32: #{vit_forward.16} parent=0 // pred_region
    _
  $region33: #{vit_forward.16} parent=0 // pred_fallthru
    _

// kernel: vit_forward.23
$region0: #{vit_forward.23}
  #allocation0 [shape = 'u32[]', space=smem, size = 0x4, offset = 0x4, fixed_abs, tag = 'smem constant byte address 0x4 - core index']
  #allocation1 [shape = 'u32[144,128]{1,0:T(1,128)}', space=vmem, size = 0x12000, scoped, tag = 'internal scratch']
  #allocation2 [shape = 'bf16[2,32]{1,0:T(2,128)(2,1)}', space=vmem, size = 0x200, scoped, tag = 'scratch operand']
  %s0 = inlined_call_operand.vmem [shape: f32[2,32], index: 0, kind: input, shape index: {}]
  %s1 = inlined_call_operand.vmem [shape: f32[1,32], index: 1, kind: input, shape index: {}]
  %s2 = inlined_call_operand.vmem [shape: f32[1,32], index: 2, kind: input, shape index: {}]
  %s3 = inlined_call_operand.vmem [shape: bf16[32,10], index: 3, kind: input, shape index: {}]
  %s4 = inlined_call_operand.vmem [shape: f32[1,10], index: 4, kind: input, shape index: {}]
  %s5 = inlined_call_operand.hbm [shape: f32[2,10], index: 5, kind: output, shape index: {}]
  %s6 = sld [smem:[#allocation0]]
  $region34: #{vit_forward.23} parent=0
    _
  %s8 = ssub.s32 1, %s6
  %s9 = scalar_select 0, %s8, %s6
  $region1: #{vit_forward.23} parent=0
    #allocation3 [shape = 'u8[1024]{0}', space=vmem, size = 0x400, scoped, tag = 'output window, operand 0, single buffered']
    #allocation4 [shape = 's32[1]{0}', space=sflag, size = 0x4, scoped, tag = 'scoped memory for vit_forward.23']
    %10 = vsyncpa [#allocation4], 0
    // Predicated region
    $region2: #{vit_forward.23} parent=1 // pred_check
      _
    $region3: #{vit_forward.23} parent=1 // pred_check_branch
      %12 = sbr.rel (0) target = $region5
    $region4: #{vit_forward.23} parent=1 // pred_region
      _
    $region5: #{vit_forward.23} parent=1 // pred_fallthru
      _
    // Predicated region
    $region6: #{vit_forward.23} parent=1 // pred_check
      _
    $region7: #{vit_forward.23} parent=1 // pred_check_branch
      %14 = sbr.rel (0) target = $region9
    $region8: #{vit_forward.23} parent=1 // pred_region
      _
    $region9: #{vit_forward.23} parent=1 // pred_fallthru
      _
    // Predicated region
    $region10: #{vit_forward.23} parent=1 // pred_check
      _
    $region11: #{vit_forward.23} parent=1 // pred_check_branch
      %16 = sbr.rel (0) target = $region13
    $region12: #{vit_forward.23} parent=1 // pred_region
      _
    $region13: #{vit_forward.23} parent=1 // pred_fallthru
      _
    // Predicated region
    $region14: #{vit_forward.23} parent=1 // pred_check
      _
    $region15: #{vit_forward.23} parent=1 // pred_check_branch
      %18 = sbr.rel (0) target = $region17
    $region16: #{vit_forward.23} parent=1 // pred_region
      _
    $region17: #{vit_forward.23} parent=1 // pred_fallthru
      _
    // Predicated region
    $region18: #{vit_forward.23} parent=1 // pred_check
      _
    $region19: #{vit_forward.23} parent=1 // pred_check_branch
      %20 = sbr.rel (0) target = $region21
    $region20: #{vit_forward.23} parent=1 // pred_region
      _
    $region21: #{vit_forward.23} parent=1 // pred_fallthru
      _
    %p22 = scmp.eq.s32.totalorder 0, 0
    // Predicated region
    $region22: #{vit_forward.23} parent=1 // pred_check
      %p23 = pneg %p22
    $region23: #{vit_forward.23} parent=1 // pred_check_branch
      %25 = sbr.rel (%p23) target = $region25
    $region24: #{vit_forward.23} parent=1 // pred_region
      %v26 = vld [vmem:[%s0] sm:$0x3]
      %vm27 = vcmask 254976
      %v28 = vsel %vm27, %v26, 0.0
      %29 = vadd.xlane.f32.xlu0 %v28
      %v30 = vpop.xlane.xlu0 %29
      %v31 = vrcp.pop 32.0
      %v32 = vmul.f32 %v30, %v31
      %v33 = vsub.f32 %v26, %v32
      %v34 = vmul.f32 %v33, %v33
      %v35 = vsel %vm27, %v34, 0.0
      %36 = vadd.xlane.f32.xlu0 %v35
      %v37 = vpop.xlane.xlu0 %36
      %v38 = vmul.f32 %v37, %v31
      %v39 = vadd.f32 %v38, 1e-05
      %v40 = vrsqrt.pop %v39
      %v41 = vmul.f32 %v33, %v40
      %v42 = vld [vmem:[%s1] sm:$0x1]
      %v44 = vlaneseq
      %v45 = vshrl.u32 %v44, 7
      %v46 = vsub.s32 0, %v45
      %v47 = vrot.slane %v42, %v46
      %v49 = vmul.f32 %v41, %v47
      %v50 = vld [vmem:[%s2] sm:$0x1]
      %v52 = vlaneseq
      %v53 = vshrl.u32 %v52, 7
      %v54 = vsub.s32 0, %v53
      %v55 = vrot.slane %v50, %v54
      %v57 = vadd.f32 %v49, %v55
      %v58 = vpack.c.bf16 %v57, %v57
      %vm59 = vcmask 253952
      %60 = vst.msk [vmem:[#allocation2] sm:$0x1] %vm59, %v58
    $region25: #{vit_forward.23} parent=1 // pred_fallthru
      _
    %v61 = vld [vmem:[#allocation2] sm:$0x1]
    %v62 = vld [vmem:[%s3] sm:$0xf]
    %v63 = vld [vmem:[%s3 + $0x4] sm:$0xf]
    %v64 = vld [vmem:[%s3 + $0x8] sm:$0xf]
    %v65 = vld [vmem:[%s3 + $0xc] sm:$0xf]
    %v66 = vld [vmem:[%s4] sm:$0x1]
    %v68 = vlaneseq
    %v69 = vshrl.u32 %v68, 7
    %v70 = vsub.s32 0, %v69
    %v71 = vrot.slane %v66, %v70
    %v77 = vunpack.c.l.b16 %v62
    %v78 = vunpack.c.l.b16 %v63
    %v79 = vunpack.c.l.b16 %v64
    %v80 = vunpack.c.l.b16 %v65
    %v81 = vpack.c.b16 %v78, %v77
    %v82 = vpack.c.b16 %v80, %v79
    %vm85 = vcmask 261120
    %v87 = vsel %vm85, %v61, 0
    %89 = vmatprep.subr.bf16.mxu0 0
    %90 = vmatpush1.bf16.msra.mxu0 %v81
    %91 = vmatprep.subr.bf16.mxu0 0
    %92 = vmatpush1.bf16.msra.mxu0 %v82
    %93 = vmatprep.subr.bf16.mxu0 0
    %94 = vmatpush1.bf16.msra.mxu0 0
    %95 = vmatprep.subr.bf16.mxu0 0
    %96 = vmatpush1.bf16.msra.mxu0 0
    %97 = vmatprep.subr.bf16.mxu0 0
    %98 = vmatpush1.bf16.msra.mxu0 0
    %99 = vmatprep.subr.bf16.mxu0 0
    %100 = vmatpush1.bf16.msra.mxu0 0
    %101 = vmatprep.subr.bf16.mxu0 0
    %102 = vmatpush1.bf16.msra.mxu0 0
    %103 = vmatprep.subr.bf16.mxu0 0
    %104 = vmatpush1.bf16.msra.mxu0 0
    %105 = vmatprep.subr.bf16.mxu0 0
    %106 = vmatpush1.bf16.msra.mxu0 0
    %107 = vmatprep.subr.bf16.mxu0 0
    %108 = vmatpush1.bf16.msra.mxu0 0
    %109 = vmatprep.subr.bf16.mxu0 0
    %110 = vmatpush1.bf16.msra.mxu0 0
    %111 = vmatprep.subr.bf16.mxu0 0
    %112 = vmatpush1.bf16.msra.mxu0 0
    %113 = vmatprep.subr.bf16.mxu0 0
    %114 = vmatpush1.bf16.msra.mxu0 0
    %115 = vmatprep.subr.bf16.mxu0 0
    %116 = vmatpush1.bf16.msra.mxu0 0
    %117 = vmatprep.subr.bf16.mxu0 0
    %118 = vmatpush1.bf16.msra.mxu0 0
    %119 = vmatprep.subr.bf16.mxu0 0
    %120 = vmatpush1.bf16.msra.mxu0 0
    %121 = vmatprep.mubr.bf16.mxu0 0
    %122 = vmatmul.mubr.bf16.gmra.mrb[0].mxu0 %v87
    %v123 = vpop.f32.mrb[0].mxu0
    %v124 = vadd.f32 %v71, %v123
    %v125 = vpop.f32.mrb[0].mxu0
    %v126 = vpop.f32.mrb[0].mxu0
    %v127 = vpop.f32.mrb[0].mxu0
    %128 = vdwg.mxu0
    %vm129 = vcmask 74752
    %130 = vst.msk [vmem:[#allocation3] sm:$0x3] %vm129, %v124
    // Predicated region
    $region26: #{vit_forward.23} parent=1 // pred_check
      _
    $region27: #{vit_forward.23} parent=1 // pred_check_branch
      %132 = sbr.rel (0) target = $region29
    $region28: #{vit_forward.23} parent=1 // pred_region
      %s134 = ssub.s32 32, 32
      %135 = vsyncadd [#allocation4], %s134
      %s137 = sshll.u32 [#allocation3], 4
      %s138 = int_to_ptr.vmem [resolvable:$true] %s137
      %140 = dma.vmem_to_hbm [thread:$0]  %s138, 32, %s5, [#allocation4]
    $region29: #{vit_forward.23} parent=1 // pred_fallthru
      _
    // Predicated region
    $region30: #{vit_forward.23} parent=1 // pred_check
      _
    $region31: #{vit_forward.23} parent=1 // pred_check_branch
      %142 = sbr.rel (0) target = $region33
    $region32: #{vit_forward.23} parent=1 // pred_region
      %143 = dma.done [#allocation4], 32
    $region33: #{vit_forward.23} parent=1 // pred_fallthru
      _
    %144 = vsyncpa [#allocation4], 1

</llo_original>
